<compile_context>
chip_gen: v5e
topology: v5e:2x2
jax: 0.10.0
libtpu: 0.0.40
codegen_flags: <defaults>
</compile_context>

<pallas_src>
import functools

import jax
import jax.numpy as jnp
from jax.experimental import pallas as pl
from jax.experimental.pallas import tpu as pltpu

LANE = 128
_LN_EPS = 1e-5


def _round_up(x, m):
    return (x + m - 1) // m * m


# ---------------------------------------------------------------------------
# in-kernel math helpers
# ---------------------------------------------------------------------------
def _ln_relu(x, gamma, beta, d_true, eps=_LN_EPS):
    """LayerNorm (+ReLU) over the last axis of a zero-padded [R, 128] block.

    `x`, `gamma`, `beta` are zero-padded past `d_true`; statistics divide by
    the true feature count so padding is exact (padded lanes stay 0).
    """
    s = jnp.sum(x, axis=-1, keepdims=True)
    ss = jnp.sum(x * x, axis=-1, keepdims=True)
    mu = s / d_true
    var = ss / d_true - mu * mu
    y = (x - mu) * jax.lax.rsqrt(var + eps) * gamma + beta
    return jnp.maximum(y, 0.0)


# ---------------------------------------------------------------------------
# edge-model kernel: tiled over E
#   in : [TE, 4*128]  = [ nf[row] | nf[col] | ef | gf[graph_index[row]] ]
#   out: [TE, 128]    = ef + fc1(relu(LN_h(fused_fc0(relu(LN_in(blocks))))))
# ---------------------------------------------------------------------------
def _edge_kernel(dims_in, d_hidden,
                 x_ref, gin_ref, bin_ref, w0_ref, b0_ref,
                 gh_ref, bh_ref, w1_ref, b1_ref, out_ref):
    x = x_ref[...]                                            # [TE, 512] f32
    blocks = []
    for k, d in enumerate(dims_in):
        xb = x[:, k * LANE:(k + 1) * LANE]
        h = _ln_relu(xb, gin_ref[k:k + 1, :], bin_ref[k:k + 1, :], d)
        blocks.append(h.astype(jnp.bfloat16))
    h = jnp.concatenate(blocks, axis=-1)                      # [TE, 512] bf16
    # fused node_row_fc0 / node_col_fc0 / edge_fc0 / graph_fc0 (block-stacked W)
    carry = jnp.dot(h, w0_ref[...],
                    preferred_element_type=jnp.float32) + b0_ref[...]
    carry = _ln_relu(carry, gh_ref[...], bh_ref[...], d_hidden)
    carry = jnp.dot(carry.astype(jnp.bfloat16), w1_ref[...],
                    preferred_element_type=jnp.float32) + b1_ref[...]
    # residual on the (padded) original edge features (block 2 of x)
    out_ref[...] = x[:, 2 * LANE:3 * LANE] + carry


# ---------------------------------------------------------------------------
# node-model kernel: tiled over N
#   in : [TN, 2*128] = [ node_feats | edge_messages ]
#   out: node_out [TN, 128] (residual applied), graph_part [TN, 128]
# ---------------------------------------------------------------------------
def _node_kernel(dims_in, d_hidden,
                 x_ref, gin_ref, bin_ref, w0_ref, b0_ref,
                 gh_ref, bh_ref, w1_ref, b1_ref,
                 node_out_ref, graph_part_ref):
    x = x_ref[...]                                            # [TN, 256] f32
    blocks = []
    for k, d in enumerate(dims_in):
        xb = x[:, k * LANE:(k + 1) * LANE]
        h = _ln_relu(xb, gin_ref[k:k + 1, :], bin_ref[k:k + 1, :], d)
        blocks.append(h.astype(jnp.bfloat16))
    h = jnp.concatenate(blocks, axis=-1)                      # [TN, 256] bf16
    carry = jnp.dot(h, w0_ref[...],
                    preferred_element_type=jnp.float32) + b0_ref[...]
    carry = _ln_relu(carry, gh_ref[...], bh_ref[...], d_hidden)
    carry = jnp.dot(carry.astype(jnp.bfloat16), w1_ref[...],
                    preferred_element_type=jnp.float32) + b1_ref[...]   # [TN, 256]
    node_out_ref[...] = x[:, 0:LANE] + carry[:, 0:LANE]       # residual
    graph_part_ref[...] = carry[:, LANE:2 * LANE]             # scattered outside


# ---------------------------------------------------------------------------
# wrapper
# ---------------------------------------------------------------------------
def _pad2(x, rows, cols):
    return jnp.pad(x, ((0, rows - x.shape[0]), (0, cols - x.shape[1])))


def _rep_spec(shape):
    """Full-array block whose index never changes -> stays VMEM-resident."""
    return pl.BlockSpec(shape, lambda i: (0,) * len(shape))


@functools.partial(jax.jit, static_argnames=("tile_e", "tile_n"))
def edge_message_passing(node_feats, edge_feats, edge_index, graph_feats,
                         graph_index, params, *, tile_e=None, tile_n=None):
    f32, bf16 = jnp.float32, jnp.bfloat16
    P = LANE
    N, Dn = node_feats.shape
    E, De = edge_feats.shape
    B, Dg = graph_feats.shape
    H = params["e_nr_w"].shape[1]

    if tile_e is None:
        tile_e = min(256, _round_up(E, 8))
    if tile_n is None:
        tile_n = min(256, _round_up(N, 8))
    assert tile_e % 8 == 0 and tile_n % 8 == 0
    E_pad = _round_up(E, tile_e)
    N_pad = _round_up(N, tile_n)

    row, col = edge_index[0], edge_index[1]
    rg = graph_index[row]

    # ---- lane-pad features and build index-based per-edge gathers ---------
    nf_p = _pad2(node_feats.astype(f32), N, P)                 # [N, 128]
    gf_p = _pad2(graph_feats.astype(f32), B, P)                # [B, 128]
    ef_p = _pad2(edge_feats.astype(f32), E_pad, P)             # [E_pad, 128]
    row_p = jnp.pad(row, (0, E_pad - E))
    col_p = jnp.pad(col, (0, E_pad - E))
    rg_p = jnp.pad(rg, (0, E_pad - E))
    edge_in = jnp.concatenate(
        [jnp.take(nf_p, row_p, axis=0),
         jnp.take(nf_p, col_p, axis=0),
         ef_p,
         jnp.take(gf_p, rg_p, axis=0)], axis=1)                # [E_pad, 512]

    p = params
    # ---- edge-net params: padded, stacked, weights in bf16 -----------------
    g_in_e = jnp.concatenate([_pad2(p["e_nr_norm_g"], 1, P),
                              _pad2(p["e_nc_norm_g"], 1, P),
                              _pad2(p["e_e_norm_g"], 1, P),
                              _pad2(p["e_g_norm_g"], 1, P)], axis=0)
    b_in_e = jnp.concatenate([_pad2(p["e_nr_norm_b"], 1, P),
                              _pad2(p["e_nc_norm_b"], 1, P),
                              _pad2(p["e_e_norm_b"], 1, P),
                              _pad2(p["e_g_norm_b"], 1, P)], axis=0)
    w0_e = jnp.concatenate([_pad2(p["e_nr_w"], P, P),
                            _pad2(p["e_nc_w"], P, P),
                            _pad2(p["e_e_w"], P, P),
                            _pad2(p["e_g_w"], P, P)], axis=0).astype(bf16)
    b0_e = _pad2(p["e_nr_b"], 1, P)
    gh_e = _pad2(p["e_h_norm_g"], 1, P)
    bh_e = _pad2(p["e_h_norm_b"], 1, P)
    w1_e = _pad2(p["e_fc1_w"], P, P).astype(bf16)
    b1_e = _pad2(p["e_fc1_b"], 1, P)

    edge_kernel = functools.partial(_edge_kernel, (Dn, Dn, De, Dg), H)
    ef_new_p = pl.pallas_call(
        edge_kernel,
        out_shape=jax.ShapeDtypeStruct((E_pad, P), f32),
        grid=(E_pad // tile_e,),
        in_specs=[pl.BlockSpec((tile_e, 4 * P), lambda i: (i, 0)),
                  _rep_spec((4, P)), _rep_spec((4, P)),
                  _rep_spec((4 * P, P)), _rep_spec((1, P)),
                  _rep_spec((1, P)), _rep_spec((1, P)),
                  _rep_spec((P, P)), _rep_spec((1, P))],
        out_specs=pl.BlockSpec((tile_e, P), lambda i: (i, 0)),
        compiler_params=pltpu.CompilerParams(
            dimension_semantics=("parallel",)),
    )(edge_in, g_in_e, b_in_e, w0_e, b0_e, gh_e, bh_e, w1_e, b1_e)

    # ---- message aggregation: index-based segment-sum (O(E*D)) ------------
    msgs_p = jax.ops.segment_sum(ef_new_p[:E], row, num_segments=N)  # [N, 128]
    node_in = jnp.concatenate(
        [jnp.pad(nf_p, ((0, N_pad - N), (0, 0))),
         jnp.pad(msgs_p, ((0, N_pad - N), (0, 0)))], axis=1)         # [N_pad, 256]

    # ---- node-net params ---------------------------------------------------
    g_in_n = jnp.concatenate([_pad2(p["n_n_norm_g"], 1, P),
                              _pad2(p["n_e_norm_g"], 1, P)], axis=0)
    b_in_n = jnp.concatenate([_pad2(p["n_n_norm_b"], 1, P),
                              _pad2(p["n_e_norm_b"], 1, P)], axis=0)
    w0_n = jnp.concatenate([_pad2(p["n_n_w"], P, P),
                            _pad2(p["n_e_w"], P, P)], axis=0).astype(bf16)
    b0_n = _pad2(p["n_n_b"], 1, P)
    gh_n = _pad2(p["n_h_norm_g"], 1, P)
    bh_n = _pad2(p["n_h_norm_b"], 1, P)
    # fc1 output laid out lane-dense: node part in cols [0:128), graph part in
    # cols [128:256) so the in-kernel split is a free 128-aligned slice.
    w1_raw, b1_raw = p["n_fc1_w"], p["n_fc1_b"]
    w1_n = jnp.zeros((P, 2 * P), f32)
    w1_n = w1_n.at[:H, :Dn].set(w1_raw[:, :Dn])
    w1_n = w1_n.at[:H, P:P + Dg].set(w1_raw[:, Dn:Dn + Dg]).astype(bf16)
    b1_n = jnp.zeros((1, 2 * P), f32)
    b1_n = b1_n.at[:, :Dn].set(b1_raw[:, :Dn])
    b1_n = b1_n.at[:, P:P + Dg].set(b1_raw[:, Dn:Dn + Dg])

    node_kernel = functools.partial(_node_kernel, (Dn, De), H)
    node_new_p, graph_part_p = pl.pallas_call(
        node_kernel,
        out_shape=(jax.ShapeDtypeStruct((N_pad, P), f32),
                   jax.ShapeDtypeStruct((N_pad, P), f32)),
        grid=(N_pad // tile_n,),
        in_specs=[pl.BlockSpec((tile_n, 2 * P), lambda i: (i, 0)),
                  _rep_spec((2, P)), _rep_spec((2, P)),
                  _rep_spec((2 * P, P)), _rep_spec((1, P)),
                  _rep_spec((1, P)), _rep_spec((1, P)),
                  _rep_spec((P, 2 * P)), _rep_spec((1, 2 * P))],
        out_specs=(pl.BlockSpec((tile_n, P), lambda i: (i, 0)),
                   pl.BlockSpec((tile_n, P), lambda i: (i, 0))),
        compiler_params=pltpu.CompilerParams(
            dimension_semantics=("parallel",)),
    )(node_in, g_in_n, b_in_n, w0_n, b0_n, gh_n, bh_n, w1_n, b1_n)

    node_out = node_new_p[:N, :Dn]
    edge_out = ef_new_p[:E, :De]
    graph_part = graph_part_p[:N, :Dg]
    graph_out = graph_feats.astype(f32) + jax.ops.segment_sum(
        graph_part, graph_index, num_segments=B)
    return node_out, edge_out, graph_out


# ---------------------------------------------------------------------------
# pure-JAX reference (gather / segment-sum form).  Matmul operands are cast to
# bf16 exactly like the kernel (f32 accumulation, f32 LayerNorm / residuals),
# so the comparison is apples-to-apples.
# ---------------------------------------------------------------------------
def _relu(x):
    return jnp.maximum(x, 0.0)


def _layer_norm(x, g, b, eps=_LN_EPS):
    mu = jnp.mean(x, axis=-1, keepdims=True)
    var = jnp.mean(x * x, axis=-1, keepdims=True) - mu * mu
    return (x - mu) * jax.lax.rsqrt(var + eps) * g + b


def _mm(a, w):
    return jnp.dot(a.astype(jnp.bfloat16), w.astype(jnp.bfloat16),
                   preferred_element_type=jnp.float32)


def reference(node_feats, edge_feats, edge_index, graph_feats, graph_index, params):
    p = params
    N, Dn = node_feats.shape
    E, De = edge_feats.shape
    B, Dg = graph_feats.shape
    row, col = edge_index[0], edge_index[1]

    # edge model
    nr_h = _mm(_relu(_layer_norm(node_feats, p["e_nr_norm_g"], p["e_nr_norm_b"])),
               p["e_nr_w"]) + p["e_nr_b"]
    nc_h = _mm(_relu(_layer_norm(node_feats, p["e_nc_norm_g"], p["e_nc_norm_b"])),
               p["e_nc_w"])
    ee_h = _mm(_relu(_layer_norm(edge_feats, p["e_e_norm_g"], p["e_e_norm_b"])),
               p["e_e_w"])
    eg_h = _mm(_relu(_layer_norm(graph_feats, p["e_g_norm_g"], p["e_g_norm_b"])),
               p["e_g_w"])
    carry = nr_h[row] + nc_h[col] + ee_h + eg_h[graph_index[row]]
    carry = _relu(_layer_norm(carry, p["e_h_norm_g"], p["e_h_norm_b"]))
    carry = _mm(carry, p["e_fc1_w"]) + p["e_fc1_b"]
    ef_new = edge_feats + carry

    # node model
    msgs = jax.ops.segment_sum(ef_new, row, num_segments=N)
    nnh = _mm(_relu(_layer_norm(node_feats, p["n_n_norm_g"], p["n_n_norm_b"])),
              p["n_n_w"]) + p["n_n_b"]
    emh = _mm(_relu(_layer_norm(msgs, p["n_e_norm_g"], p["n_e_norm_b"])),
              p["n_e_w"])
    carry2 = _relu(_layer_norm(nnh + emh, p["n_h_norm_g"], p["n_h_norm_b"]))
    carry2 = _mm(carry2, p["n_fc1_w"]) + p["n_fc1_b"]
    node_out = node_feats + carry2[:, :Dn]
    graph_out = graph_feats + jax.ops.segment_sum(
        carry2[:, Dn:Dn + Dg], graph_index, num_segments=B)
    return node_out, ef_new, graph_out


# ---------------------------------------------------------------------------
# deterministic parameter init (matches module __init__ shapes)
# ---------------------------------------------------------------------------
def init_params(key, node_dim, edge_dim, graph_dim, hidden_dim):
    keys = jax.random.split(key, 32)
    ki = iter(keys)

    def lin(k, din, dout):
        return jax.random.normal(k, (din, dout), jnp.float32) / jnp.sqrt(din)

    def ln_params(k, d):
        k1, k2 = jax.random.split(k)
        g = 1.0 + 0.1 * jax.random.normal(k1, (1, d), jnp.float32)
        b = 0.1 * jax.random.normal(k2, (1, d), jnp.float32)
        return g, b

    p = {}
    p["e_nr_norm_g"], p["e_nr_norm_b"] = ln_params(next(ki), node_dim)
    p["e_nc_norm_g"], p["e_nc_norm_b"] = ln_params(next(ki), node_dim)
    p["e_e_norm_g"], p["e_e_norm_b"] = ln_params(next(ki), edge_dim)
    p["e_g_norm_g"], p["e_g_norm_b"] = ln_params(next(ki), graph_dim)
    p["e_h_norm_g"], p["e_h_norm_b"] = ln_params(next(ki), hidden_dim)
    p["e_nr_w"] = lin(next(ki), node_dim, hidden_dim)
    p["e_nr_b"] = 0.1 * jax.random.normal(next(ki), (1, hidden_dim), jnp.float32)
    p["e_nc_w"] = lin(next(ki), node_dim, hidden_dim)
    p["e_e_w"] = lin(next(ki), edge_dim, hidden_dim)
    p["e_g_w"] = lin(next(ki), graph_dim, hidden_dim)
    p["e_fc1_w"] = lin(next(ki), hidden_dim, edge_dim)
    p["e_fc1_b"] = 0.1 * jax.random.normal(next(ki), (1, edge_dim), jnp.float32)

    p["n_n_norm_g"], p["n_n_norm_b"] = ln_params(next(ki), node_dim)
    p["n_e_norm_g"], p["n_e_norm_b"] = ln_params(next(ki), edge_dim)
    p["n_h_norm_g"], p["n_h_norm_b"] = ln_params(next(ki), hidden_dim)
    p["n_n_w"] = lin(next(ki), node_dim, hidden_dim)
    p["n_n_b"] = 0.1 * jax.random.normal(next(ki), (1, hidden_dim), jnp.float32)
    p["n_e_w"] = lin(next(ki), edge_dim, hidden_dim)
    p["n_fc1_w"] = lin(next(ki), hidden_dim, node_dim + graph_dim)
    p["n_fc1_b"] = 0.1 * jax.random.normal(next(ki), (1, node_dim + graph_dim),
                                           jnp.float32)
    return p


# ---------------------------------------------------------------------------
if __name__ == "__main__":
    node_dim, edge_dim, graph_dim, hidden_dim = 16, 8, 12, 32
    num_graphs = 2
    nodes_per_graph = 8
    N = num_graphs * nodes_per_graph          # 16 nodes
    key = jax.random.PRNGKey(0)
    k1, k2, k3, k4 = jax.random.split(key, 4)

    params = init_params(k4, node_dim, edge_dim, graph_dim, hidden_dim)

    node_feats = jax.random.normal(k1, (N, node_dim), jnp.float32)
    graph_feats = jax.random.normal(k3, (num_graphs, graph_dim), jnp.float32)
    graph_index = jnp.repeat(jnp.arange(num_graphs, dtype=jnp.int32), nodes_per_graph)

    # bidirectional ring edges inside each graph (row/col stay within one graph)
    rows, cols = [], []
    for g in range(num_graphs):
        base = g * nodes_per_graph
        for i in range(nodes_per_graph):
            a = base + i
            b = base + (i + 1) % nodes_per_graph
            rows += [a, b]
            cols += [b, a]
    edge_index = jnp.stack([jnp.array(rows, jnp.int32), jnp.array(cols, jnp.int32)])
    E = edge_index.shape[1]                   # 32 edges
    edge_feats = jax.random.normal(k2, (E, edge_feats_dim := edge_dim), jnp.float32)

    # small tiles so the 1-D grids actually have several pipelined steps
    outs = edge_message_passing(node_feats, edge_feats, edge_index,
                                graph_feats, graph_index, params,
                                tile_e=16, tile_n=8)
    outs = jax.block_until_ready(outs)

    refs = reference(node_feats, edge_feats, edge_index, graph_feats,
                     graph_index, params)

    # Both kernel and reference use bf16 matmul operands with f32 accumulation;
    # the mean check is the tight one, the max check allows for a rare one-ulp
    # bf16 rounding flip between the Mosaic and XLA compute paths.
    for o, r in zip(outs, refs):
        assert o.shape == r.shape and o.dtype == r.dtype
        err = jnp.abs(o - r)
        assert float(jnp.max(err)) < 2e-2, float(jnp.max(err))
        assert float(jnp.mean(err)) < 5e-4, float(jnp.mean(err))

    print("KERNEL_OK")
</pallas_src>

<mosaic_0001>
module attributes {stable_mosaic.version = 11 : i64} {
  func.func @_edge_kernel(%arg0: i32, %arg1: memref<16x512xf32, #tpu.memory_space<vmem>>, %arg2: memref<4x128xf32, #tpu.memory_space<vmem>>, %arg3: memref<4x128xf32, #tpu.memory_space<vmem>>, %arg4: memref<512x128xbf16, #tpu.memory_space<vmem>>, %arg5: memref<1x128xf32, #tpu.memory_space<vmem>>, %arg6: memref<1x128xf32, #tpu.memory_space<vmem>>, %arg7: memref<1x128xf32, #tpu.memory_space<vmem>>, %arg8: memref<128x128xbf16, #tpu.memory_space<vmem>>, %arg9: memref<1x128xf32, #tpu.memory_space<vmem>>, %arg10: memref<16x128xf32, #tpu.memory_space<vmem>>) attributes {dimension_semantics = [#tpu.dimension_semantics<parallel>], iteration_bounds = array<i64: 2>, scalar_prefetch = 0 : i64, scratch_operands = 0 : i64, tpu.core_type = #tpu.core_type<tc>, window_params = [{transform_indices = @transform_0, window_bounds = array<i64: 16, 512>}, {pipeline_mode = #tpu.pipeline_mode<synchronous>, transform_indices = @transform_1, window_bounds = array<i64: 4, 128>}, {pipeline_mode = #tpu.pipeline_mode<synchronous>, transform_indices = @transform_2, window_bounds = array<i64: 4, 128>}, {pipeline_mode = #tpu.pipeline_mode<synchronous>, transform_indices = @transform_3, window_bounds = array<i64: 512, 128>}, {pipeline_mode = #tpu.pipeline_mode<synchronous>, transform_indices = @transform_4, window_bounds = array<i64: 1, 128>}, {pipeline_mode = #tpu.pipeline_mode<synchronous>, transform_indices = @transform_5, window_bounds = array<i64: 1, 128>}, {pipeline_mode = #tpu.pipeline_mode<synchronous>, transform_indices = @transform_6, window_bounds = array<i64: 1, 128>}, {pipeline_mode = #tpu.pipeline_mode<synchronous>, transform_indices = @transform_7, window_bounds = array<i64: 128, 128>}, {pipeline_mode = #tpu.pipeline_mode<synchronous>, transform_indices = @transform_8, window_bounds = array<i64: 1, 128>}, {transform_indices = @transform_9, window_bounds = array<i64: 16, 128>}]} {
    %c0 = arith.constant 0 : index
    %c0_0 = arith.constant 0 : index
    %0 = vector.load %arg1[%c0, %c0_0] : memref<16x512xf32, #tpu.memory_space<vmem>>, vector<16x512xf32>
    %1 = vector.extract_strided_slice %0 {offsets = [0, 0], sizes = [16, 128], strides = [1, 1]} : vector<16x512xf32> to vector<16x128xf32>
    %c0_1 = arith.constant 0 : index
    %c0_2 = arith.constant 0 : index
    %2 = vector.load %arg2[%c0_1, %c0_2] : memref<4x128xf32, #tpu.memory_space<vmem>>, vector<1x128xf32>
    %c0_3 = arith.constant 0 : index
    %c0_4 = arith.constant 0 : index
    %3 = vector.load %arg3[%c0_3, %c0_4] : memref<4x128xf32, #tpu.memory_space<vmem>>, vector<1x128xf32>
    %cst = arith.constant dense<0.000000e+00> : vector<16xf32>
    %4 = vector.multi_reduction <add>, %1, %cst [1] : vector<16x128xf32> to vector<16xf32>
    %5 = vector.shape_cast %4 : vector<16xf32> to vector<16x1xf32>
    %6 = arith.mulf %1, %1 : vector<16x128xf32>
    %cst_5 = arith.constant dense<0.000000e+00> : vector<16xf32>
    %7 = vector.multi_reduction <add>, %6, %cst_5 [1] : vector<16x128xf32> to vector<16xf32>
    %8 = vector.shape_cast %7 : vector<16xf32> to vector<16x1xf32>
    %cst_6 = arith.constant 1.600000e+01 : f32
    %9 = vector.broadcast %cst_6 : f32 to vector<16x1xf32>
    %10 = arith.divf %5, %9 : vector<16x1xf32>
    %cst_7 = arith.constant 1.600000e+01 : f32
    %11 = vector.broadcast %cst_7 : f32 to vector<16x1xf32>
    %12 = arith.divf %8, %11 : vector<16x1xf32>
    %13 = arith.mulf %10, %10 : vector<16x1xf32>
    %14 = arith.subf %12, %13 : vector<16x1xf32>
    %15 = vector.broadcast %10 : vector<16x1xf32> to vector<16x128xf32>
    %16 = arith.subf %1, %15 : vector<16x128xf32>
    %cst_8 = arith.constant 9.99999974E-6 : f32
    %17 = vector.broadcast %cst_8 : f32 to vector<16x1xf32>
    %18 = arith.addf %14, %17 : vector<16x1xf32>
    %19 = math.rsqrt %18 : vector<16x1xf32>
    %20 = vector.broadcast %19 : vector<16x1xf32> to vector<16x128xf32>
    %21 = arith.mulf %16, %20 : vector<16x128xf32>
    %22 = vector.broadcast %2 : vector<1x128xf32> to vector<16x128xf32>
    %23 = arith.mulf %21, %22 : vector<16x128xf32>
    %24 = vector.broadcast %3 : vector<1x128xf32> to vector<16x128xf32>
    %25 = arith.addf %23, %24 : vector<16x128xf32>
    %cst_9 = arith.constant 0.000000e+00 : f32
    %26 = vector.broadcast %cst_9 : f32 to vector<16x128xf32>
    %27 = arith.maximumf %25, %26 : vector<16x128xf32>
    %28 = arith.truncf %27 : vector<16x128xf32> to vector<16x128xbf16>
    %29 = vector.extract_strided_slice %0 {offsets = [0, 128], sizes = [16, 128], strides = [1, 1]} : vector<16x512xf32> to vector<16x128xf32>
    %c1 = arith.constant 1 : index
    %c0_10 = arith.constant 0 : index
    %30 = vector.load %arg2[%c1, %c0_10] : memref<4x128xf32, #tpu.memory_space<vmem>>, vector<1x128xf32>
    %c1_11 = arith.constant 1 : index
    %c0_12 = arith.constant 0 : index
    %31 = vector.load %arg3[%c1_11, %c0_12] : memref<4x128xf32, #tpu.memory_space<vmem>>, vector<1x128xf32>
    %cst_13 = arith.constant dense<0.000000e+00> : vector<16xf32>
    %32 = vector.multi_reduction <add>, %29, %cst_13 [1] : vector<16x128xf32> to vector<16xf32>
    %33 = vector.shape_cast %32 : vector<16xf32> to vector<16x1xf32>
    %34 = arith.mulf %29, %29 : vector<16x128xf32>
    %cst_14 = arith.constant dense<0.000000e+00> : vector<16xf32>
    %35 = vector.multi_reduction <add>, %34, %cst_14 [1] : vector<16x128xf32> to vector<16xf32>
    %36 = vector.shape_cast %35 : vector<16xf32> to vector<16x1xf32>
    %cst_15 = arith.constant 1.600000e+01 : f32
    %37 = vector.broadcast %cst_15 : f32 to vector<16x1xf32>
    %38 = arith.divf %33, %37 : vector<16x1xf32>
    %cst_16 = arith.constant 1.600000e+01 : f32
    %39 = vector.broadcast %cst_16 : f32 to vector<16x1xf32>
    %40 = arith.divf %36, %39 : vector<16x1xf32>
    %41 = arith.mulf %38, %38 : vector<16x1xf32>
    %42 = arith.subf %40, %41 : vector<16x1xf32>
    %43 = vector.broadcast %38 : vector<16x1xf32> to vector<16x128xf32>
    %44 = arith.subf %29, %43 : vector<16x128xf32>
    %cst_17 = arith.constant 9.99999974E-6 : f32
    %45 = vector.broadcast %cst_17 : f32 to vector<16x1xf32>
    %46 = arith.addf %42, %45 : vector<16x1xf32>
    %47 = math.rsqrt %46 : vector<16x1xf32>
    %48 = vector.broadcast %47 : vector<16x1xf32> to vector<16x128xf32>
    %49 = arith.mulf %44, %48 : vector<16x128xf32>
    %50 = vector.broadcast %30 : vector<1x128xf32> to vector<16x128xf32>
    %51 = arith.mulf %49, %50 : vector<16x128xf32>
    %52 = vector.broadcast %31 : vector<1x128xf32> to vector<16x128xf32>
    %53 = arith.addf %51, %52 : vector<16x128xf32>
    %cst_18 = arith.constant 0.000000e+00 : f32
    %54 = vector.broadcast %cst_18 : f32 to vector<16x128xf32>
    %55 = arith.maximumf %53, %54 : vector<16x128xf32>
    %56 = arith.truncf %55 : vector<16x128xf32> to vector<16x128xbf16>
    %57 = vector.extract_strided_slice %0 {offsets = [0, 256], sizes = [16, 128], strides = [1, 1]} : vector<16x512xf32> to vector<16x128xf32>
    %c2 = arith.constant 2 : index
    %c0_19 = arith.constant 0 : index
    %58 = vector.load %arg2[%c2, %c0_19] : memref<4x128xf32, #tpu.memory_space<vmem>>, vector<1x128xf32>
    %c2_20 = arith.constant 2 : index
    %c0_21 = arith.constant 0 : index
    %59 = vector.load %arg3[%c2_20, %c0_21] : memref<4x128xf32, #tpu.memory_space<vmem>>, vector<1x128xf32>
    %cst_22 = arith.constant dense<0.000000e+00> : vector<16xf32>
    %60 = vector.multi_reduction <add>, %57, %cst_22 [1] : vector<16x128xf32> to vector<16xf32>
    %61 = vector.shape_cast %60 : vector<16xf32> to vector<16x1xf32>
    %62 = arith.mulf %57, %57 : vector<16x128xf32>
    %cst_23 = arith.constant dense<0.000000e+00> : vector<16xf32>
    %63 = vector.multi_reduction <add>, %62, %cst_23 [1] : vector<16x128xf32> to vector<16xf32>
    %64 = vector.shape_cast %63 : vector<16xf32> to vector<16x1xf32>
    %cst_24 = arith.constant 8.000000e+00 : f32
    %65 = vector.broadcast %cst_24 : f32 to vector<16x1xf32>
    %66 = arith.divf %61, %65 : vector<16x1xf32>
    %cst_25 = arith.constant 8.000000e+00 : f32
    %67 = vector.broadcast %cst_25 : f32 to vector<16x1xf32>
    %68 = arith.divf %64, %67 : vector<16x1xf32>
    %69 = arith.mulf %66, %66 : vector<16x1xf32>
    %70 = arith.subf %68, %69 : vector<16x1xf32>
    %71 = vector.broadcast %66 : vector<16x1xf32> to vector<16x128xf32>
    %72 = arith.subf %57, %71 : vector<16x128xf32>
    %cst_26 = arith.constant 9.99999974E-6 : f32
    %73 = vector.broadcast %cst_26 : f32 to vector<16x1xf32>
    %74 = arith.addf %70, %73 : vector<16x1xf32>
    %75 = math.rsqrt %74 : vector<16x1xf32>
    %76 = vector.broadcast %75 : vector<16x1xf32> to vector<16x128xf32>
    %77 = arith.mulf %72, %76 : vector<16x128xf32>
    %78 = vector.broadcast %58 : vector<1x128xf32> to vector<16x128xf32>
    %79 = arith.mulf %77, %78 : vector<16x128xf32>
    %80 = vector.broadcast %59 : vector<1x128xf32> to vector<16x128xf32>
    %81 = arith.addf %79, %80 : vector<16x128xf32>
    %cst_27 = arith.constant 0.000000e+00 : f32
    %82 = vector.broadcast %cst_27 : f32 to vector<16x128xf32>
    %83 = arith.maximumf %81, %82 : vector<16x128xf32>
    %84 = arith.truncf %83 : vector<16x128xf32> to vector<16x128xbf16>
    %85 = vector.extract_strided_slice %0 {offsets = [0, 384], sizes = [16, 128], strides = [1, 1]} : vector<16x512xf32> to vector<16x128xf32>
    %c3 = arith.constant 3 : index
    %c0_28 = arith.constant 0 : index
    %86 = vector.load %arg2[%c3, %c0_28] : memref<4x128xf32, #tpu.memory_space<vmem>>, vector<1x128xf32>
    %c3_29 = arith.constant 3 : index
    %c0_30 = arith.constant 0 : index
    %87 = vector.load %arg3[%c3_29, %c0_30] : memref<4x128xf32, #tpu.memory_space<vmem>>, vector<1x128xf32>
    %cst_31 = arith.constant dense<0.000000e+00> : vector<16xf32>
    %88 = vector.multi_reduction <add>, %85, %cst_31 [1] : vector<16x128xf32> to vector<16xf32>
    %89 = vector.shape_cast %88 : vector<16xf32> to vector<16x1xf32>
    %90 = arith.mulf %85, %85 : vector<16x128xf32>
    %cst_32 = arith.constant dense<0.000000e+00> : vector<16xf32>
    %91 = vector.multi_reduction <add>, %90, %cst_32 [1] : vector<16x128xf32> to vector<16xf32>
    %92 = vector.shape_cast %91 : vector<16xf32> to vector<16x1xf32>
    %cst_33 = arith.constant 1.200000e+01 : f32
    %93 = vector.broadcast %cst_33 : f32 to vector<16x1xf32>
    %94 = arith.divf %89, %93 : vector<16x1xf32>
    %cst_34 = arith.constant 1.200000e+01 : f32
    %95 = vector.broadcast %cst_34 : f32 to vector<16x1xf32>
    %96 = arith.divf %92, %95 : vector<16x1xf32>
    %97 = arith.mulf %94, %94 : vector<16x1xf32>
    %98 = arith.subf %96, %97 : vector<16x1xf32>
    %99 = vector.broadcast %94 : vector<16x1xf32> to vector<16x128xf32>
    %100 = arith.subf %85, %99 : vector<16x128xf32>
    %cst_35 = arith.constant 9.99999974E-6 : f32
    %101 = vector.broadcast %cst_35 : f32 to vector<16x1xf32>
    %102 = arith.addf %98, %101 : vector<16x1xf32>
    %103 = math.rsqrt %102 : vector<16x1xf32>
    %104 = vector.broadcast %103 : vector<16x1xf32> to vector<16x128xf32>
    %105 = arith.mulf %100, %104 : vector<16x128xf32>
    %106 = vector.broadcast %86 : vector<1x128xf32> to vector<16x128xf32>
    %107 = arith.mulf %105, %106 : vector<16x128xf32>
    %108 = vector.broadcast %87 : vector<1x128xf32> to vector<16x128xf32>
    %109 = arith.addf %107, %108 : vector<16x128xf32>
    %cst_36 = arith.constant 0.000000e+00 : f32
    %110 = vector.broadcast %cst_36 : f32 to vector<16x128xf32>
    %111 = arith.maximumf %109, %110 : vector<16x128xf32>
    %112 = arith.truncf %111 : vector<16x128xf32> to vector<16x128xbf16>
    %113 = tpu.concatenate %28, %56, %84, %112 in 1 : vector<16x128xbf16>, vector<16x128xbf16>, vector<16x128xbf16>, vector<16x128xbf16> -> vector<16x512xbf16>
    %c0_37 = arith.constant 0 : index
    %c0_38 = arith.constant 0 : index
    %114 = vector.load %arg4[%c0_37, %c0_38] : memref<512x128xbf16, #tpu.memory_space<vmem>>, vector<512x128xbf16>
    %cst_39 = arith.constant dense<0.000000e+00> : vector<16x128xf32>
    %115 = tpu.matmul %113, %114, %cst_39 {dimension_numbers = #tpu.dot_dimension_numbers<[1], [0], [0], [1], [0, 0, 1, 1], [], []>} : vector<16x512xbf16>, vector<512x128xbf16>, vector<16x128xf32> -> vector<16x128xf32>
    %c0_40 = arith.constant 0 : index
    %c0_41 = arith.constant 0 : index
    %116 = vector.load %arg5[%c0_40, %c0_41] : memref<1x128xf32, #tpu.memory_space<vmem>>, vector<1x128xf32>
    %117 = vector.broadcast %116 : vector<1x128xf32> to vector<16x128xf32>
    %118 = arith.addf %115, %117 : vector<16x128xf32>
    %c0_42 = arith.constant 0 : index
    %c0_43 = arith.constant 0 : index
    %119 = vector.load %arg6[%c0_42, %c0_43] : memref<1x128xf32, #tpu.memory_space<vmem>>, vector<1x128xf32>
    %c0_44 = arith.constant 0 : index
    %c0_45 = arith.constant 0 : index
    %120 = vector.load %arg7[%c0_44, %c0_45] : memref<1x128xf32, #tpu.memory_space<vmem>>, vector<1x128xf32>
    %cst_46 = arith.constant dense<0.000000e+00> : vector<16xf32>
    %121 = vector.multi_reduction <add>, %118, %cst_46 [1] : vector<16x128xf32> to vector<16xf32>
    %122 = vector.shape_cast %121 : vector<16xf32> to vector<16x1xf32>
    %123 = arith.mulf %118, %118 : vector<16x128xf32>
    %cst_47 = arith.constant dense<0.000000e+00> : vector<16xf32>
    %124 = vector.multi_reduction <add>, %123, %cst_47 [1] : vector<16x128xf32> to vector<16xf32>
    %125 = vector.shape_cast %124 : vector<16xf32> to vector<16x1xf32>
    %cst_48 = arith.constant 3.200000e+01 : f32
    %126 = vector.broadcast %cst_48 : f32 to vector<16x1xf32>
    %127 = arith.divf %122, %126 : vector<16x1xf32>
    %cst_49 = arith.constant 3.200000e+01 : f32
    %128 = vector.broadcast %cst_49 : f32 to vector<16x1xf32>
    %129 = arith.divf %125, %128 : vector<16x1xf32>
    %130 = arith.mulf %127, %127 : vector<16x1xf32>
    %131 = arith.subf %129, %130 : vector<16x1xf32>
    %132 = vector.broadcast %127 : vector<16x1xf32> to vector<16x128xf32>
    %133 = arith.subf %118, %132 : vector<16x128xf32>
    %cst_50 = arith.constant 9.99999974E-6 : f32
    %134 = vector.broadcast %cst_50 : f32 to vector<16x1xf32>
    %135 = arith.addf %131, %134 : vector<16x1xf32>
    %136 = math.rsqrt %135 : vector<16x1xf32>
    %137 = vector.broadcast %136 : vector<16x1xf32> to vector<16x128xf32>
    %138 = arith.mulf %133, %137 : vector<16x128xf32>
    %139 = vector.broadcast %119 : vector<1x128xf32> to vector<16x128xf32>
    %140 = arith.mulf %138, %139 : vector<16x128xf32>
    %141 = vector.broadcast %120 : vector<1x128xf32> to vector<16x128xf32>
    %142 = arith.addf %140, %141 : vector<16x128xf32>
    %cst_51 = arith.constant 0.000000e+00 : f32
    %143 = vector.broadcast %cst_51 : f32 to vector<16x128xf32>
    %144 = arith.maximumf %142, %143 : vector<16x128xf32>
    %145 = arith.truncf %144 : vector<16x128xf32> to vector<16x128xbf16>
    %c0_52 = arith.constant 0 : index
    %c0_53 = arith.constant 0 : index
    %146 = vector.load %arg8[%c0_52, %c0_53] : memref<128x128xbf16, #tpu.memory_space<vmem>>, vector<128x128xbf16>
    %cst_54 = arith.constant dense<0.000000e+00> : vector<16x128xf32>
    %147 = tpu.matmul %145, %146, %cst_54 {dimension_numbers = #tpu.dot_dimension_numbers<[1], [0], [0], [1], [0, 0, 1, 1], [], []>} : vector<16x128xbf16>, vector<128x128xbf16>, vector<16x128xf32> -> vector<16x128xf32>
    %c0_55 = arith.constant 0 : index
    %c0_56 = arith.constant 0 : index
    %148 = vector.load %arg9[%c0_55, %c0_56] : memref<1x128xf32, #tpu.memory_space<vmem>>, vector<1x128xf32>
    %149 = vector.broadcast %148 : vector<1x128xf32> to vector<16x128xf32>
    %150 = arith.addf %147, %149 : vector<16x128xf32>
    %151 = vector.extract_strided_slice %0 {offsets = [0, 256], sizes = [16, 128], strides = [1, 1]} : vector<16x512xf32> to vector<16x128xf32>
    %152 = arith.addf %151, %150 : vector<16x128xf32>
    %c0_57 = arith.constant 0 : index
    %c0_58 = arith.constant 0 : index
    %153 = vector.load %arg10[%c0_57, %c0_58] : memref<16x128xf32, #tpu.memory_space<vmem>>, vector<16x128xf32>
    tpu.vector_store %arg10[%c0_57, %c0_58], %152 {strides = array<i32>} : memref<16x128xf32, #tpu.memory_space<vmem>>, vector<16x128xf32>,
    return
  }
  func.func @transform_0(%arg0: i32) -> (i32, i32) {
    %c0_i32 = arith.constant 0 : i32
    %c0_i32_0 = arith.constant 0 : i32
    return %arg0, %c0_i32 : i32, i32
  }
  func.func @transform_1(%arg0: i32) -> (i32, i32) {
    %c0_i32 = arith.constant 0 : i32
    %c0_i32_0 = arith.constant 0 : i32
    %c0_i32_1 = arith.constant 0 : i32
    return %c0_i32, %c0_i32_0 : i32, i32
  }
  func.func @transform_2(%arg0: i32) -> (i32, i32) {
    %c0_i32 = arith.constant 0 : i32
    %c0_i32_0 = arith.constant 0 : i32
    %c0_i32_1 = arith.constant 0 : i32
    return %c0_i32, %c0_i32_0 : i32, i32
  }
  func.func @transform_3(%arg0: i32) -> (i32, i32) {
    %c0_i32 = arith.constant 0 : i32
    %c0_i32_0 = arith.constant 0 : i32
    %c0_i32_1 = arith.constant 0 : i32
    return %c0_i32, %c0_i32_0 : i32, i32
  }
  func.func @transform_4(%arg0: i32) -> (i32, i32) {
    %c0_i32 = arith.constant 0 : i32
    %c0_i32_0 = arith.constant 0 : i32
    %c0_i32_1 = arith.constant 0 : i32
    return %c0_i32, %c0_i32_0 : i32, i32
  }
  func.func @transform_5(%arg0: i32) -> (i32, i32) {
    %c0_i32 = arith.constant 0 : i32
    %c0_i32_0 = arith.constant 0 : i32
    %c0_i32_1 = arith.constant 0 : i32
    return %c0_i32, %c0_i32_0 : i32, i32
  }
  func.func @transform_6(%arg0: i32) -> (i32, i32) {
    %c0_i32 = arith.constant 0 : i32
    %c0_i32_0 = arith.constant 0 : i32
    %c0_i32_1 = arith.constant 0 : i32
    return %c0_i32, %c0_i32_0 : i32, i32
  }
  func.func @transform_7(%arg0: i32) -> (i32, i32) {
    %c0_i32 = arith.constant 0 : i32
    %c0_i32_0 = arith.constant 0 : i32
    %c0_i32_1 = arith.constant 0 : i32
    return %c0_i32, %c0_i32_0 : i32, i32
  }
  func.func @transform_8(%arg0: i32) -> (i32, i32) {
    %c0_i32 = arith.constant 0 : i32
    %c0_i32_0 = arith.constant 0 : i32
    %c0_i32_1 = arith.constant 0 : i32
    return %c0_i32, %c0_i32_0 : i32, i32
  }
  func.func @transform_9(%arg0: i32) -> (i32, i32) {
    %c0_i32 = arith.constant 0 : i32
    %c0_i32_0 = arith.constant 0 : i32
    return %arg0, %c0_i32 : i32, i32
  }
}

module attributes {stable_mosaic.version = 11 : i64} {
  func.func @_node_kernel(%arg0: i32, %arg1: memref<8x256xf32, #tpu.memory_space<vmem>>, %arg2: memref<2x128xf32, #tpu.memory_space<vmem>>, %arg3: memref<2x128xf32, #tpu.memory_space<vmem>>, %arg4: memref<256x128xbf16, #tpu.memory_space<vmem>>, %arg5: memref<1x128xf32, #tpu.memory_space<vmem>>, %arg6: memref<1x128xf32, #tpu.memory_space<vmem>>, %arg7: memref<1x128xf32, #tpu.memory_space<vmem>>, %arg8: memref<128x256xbf16, #tpu.memory_space<vmem>>, %arg9: memref<1x256xf32, #tpu.memory_space<vmem>>, %arg10: memref<8x128xf32, #tpu.memory_space<vmem>>, %arg11: memref<8x128xf32, #tpu.memory_space<vmem>>) attributes {dimension_semantics = [#tpu.dimension_semantics<parallel>], iteration_bounds = array<i64: 2>, scalar_prefetch = 0 : i64, scratch_operands = 0 : i64, tpu.core_type = #tpu.core_type<tc>, window_params = [{transform_indices = @transform_0, window_bounds = array<i64: 8, 256>}, {pipeline_mode = #tpu.pipeline_mode<synchronous>, transform_indices = @transform_1, window_bounds = array<i64: 2, 128>}, {pipeline_mode = #tpu.pipeline_mode<synchronous>, transform_indices = @transform_2, window_bounds = array<i64: 2, 128>}, {pipeline_mode = #tpu.pipeline_mode<synchronous>, transform_indices = @transform_3, window_bounds = array<i64: 256, 128>}, {pipeline_mode = #tpu.pipeline_mode<synchronous>, transform_indices = @transform_4, window_bounds = array<i64: 1, 128>}, {pipeline_mode = #tpu.pipeline_mode<synchronous>, transform_indices = @transform_5, window_bounds = array<i64: 1, 128>}, {pipeline_mode = #tpu.pipeline_mode<synchronous>, transform_indices = @transform_6, window_bounds = array<i64: 1, 128>}, {pipeline_mode = #tpu.pipeline_mode<synchronous>, transform_indices = @transform_7, window_bounds = array<i64: 128, 256>}, {pipeline_mode = #tpu.pipeline_mode<synchronous>, transform_indices = @transform_8, window_bounds = array<i64: 1, 256>}, {transform_indices = @transform_9, window_bounds = array<i64: 8, 128>}, {transform_indices = @transform_10, window_bounds = array<i64: 8, 128>}]} {
    %c0 = arith.constant 0 : index
    %c0_0 = arith.constant 0 : index
    %0 = vector.load %arg1[%c0, %c0_0] : memref<8x256xf32, #tpu.memory_space<vmem>>, vector<8x256xf32>
    %1 = vector.extract_strided_slice %0 {offsets = [0, 0], sizes = [8, 128], strides = [1, 1]} : vector<8x256xf32> to vector<8x128xf32>
    %c0_1 = arith.constant 0 : index
    %c0_2 = arith.constant 0 : index
    %2 = vector.load %arg2[%c0_1, %c0_2] : memref<2x128xf32, #tpu.memory_space<vmem>>, vector<1x128xf32>
    %c0_3 = arith.constant 0 : index
    %c0_4 = arith.constant 0 : index
    %3 = vector.load %arg3[%c0_3, %c0_4] : memref<2x128xf32, #tpu.memory_space<vmem>>, vector<1x128xf32>
    %cst = arith.constant dense<0.000000e+00> : vector<8xf32>
    %4 = vector.multi_reduction <add>, %1, %cst [1] : vector<8x128xf32> to vector<8xf32>
    %5 = vector.shape_cast %4 : vector<8xf32> to vector<8x1xf32>
    %6 = arith.mulf %1, %1 : vector<8x128xf32>
    %cst_5 = arith.constant dense<0.000000e+00> : vector<8xf32>
    %7 = vector.multi_reduction <add>, %6, %cst_5 [1] : vector<8x128xf32> to vector<8xf32>
    %8 = vector.shape_cast %7 : vector<8xf32> to vector<8x1xf32>
    %cst_6 = arith.constant 1.600000e+01 : f32
    %9 = vector.broadcast %cst_6 : f32 to vector<8x1xf32>
    %10 = arith.divf %5, %9 : vector<8x1xf32>
    %cst_7 = arith.constant 1.600000e+01 : f32
    %11 = vector.broadcast %cst_7 : f32 to vector<8x1xf32>
    %12 = arith.divf %8, %11 : vector<8x1xf32>
    %13 = arith.mulf %10, %10 : vector<8x1xf32>
    %14 = arith.subf %12, %13 : vector<8x1xf32>
    %15 = vector.broadcast %10 : vector<8x1xf32> to vector<8x128xf32>
    %16 = arith.subf %1, %15 : vector<8x128xf32>
    %cst_8 = arith.constant 9.99999974E-6 : f32
    %17 = vector.broadcast %cst_8 : f32 to vector<8x1xf32>
    %18 = arith.addf %14, %17 : vector<8x1xf32>
    %19 = math.rsqrt %18 : vector<8x1xf32>
    %20 = vector.broadcast %19 : vector<8x1xf32> to vector<8x128xf32>
    %21 = arith.mulf %16, %20 : vector<8x128xf32>
    %22 = vector.broadcast %2 : vector<1x128xf32> to vector<8x128xf32>
    %23 = arith.mulf %21, %22 : vector<8x128xf32>
    %24 = vector.broadcast %3 : vector<1x128xf32> to vector<8x128xf32>
    %25 = arith.addf %23, %24 : vector<8x128xf32>
    %cst_9 = arith.constant 0.000000e+00 : f32
    %26 = vector.broadcast %cst_9 : f32 to vector<8x128xf32>
    %27 = arith.maximumf %25, %26 : vector<8x128xf32>
    %28 = arith.truncf %27 : vector<8x128xf32> to vector<8x128xbf16>
    %29 = vector.extract_strided_slice %0 {offsets = [0, 128], sizes = [8, 128], strides = [1, 1]} : vector<8x256xf32> to vector<8x128xf32>
    %c1 = arith.constant 1 : index
    %c0_10 = arith.constant 0 : index
    %30 = vector.load %arg2[%c1, %c0_10] : memref<2x128xf32, #tpu.memory_space<vmem>>, vector<1x128xf32>
    %c1_11 = arith.constant 1 : index
    %c0_12 = arith.constant 0 : index
    %31 = vector.load %arg3[%c1_11, %c0_12] : memref<2x128xf32, #tpu.memory_space<vmem>>, vector<1x128xf32>
    %cst_13 = arith.constant dense<0.000000e+00> : vector<8xf32>
    %32 = vector.multi_reduction <add>, %29, %cst_13 [1] : vector<8x128xf32> to vector<8xf32>
    %33 = vector.shape_cast %32 : vector<8xf32> to vector<8x1xf32>
    %34 = arith.mulf %29, %29 : vector<8x128xf32>
    %cst_14 = arith.constant dense<0.000000e+00> : vector<8xf32>
    %35 = vector.multi_reduction <add>, %34, %cst_14 [1] : vector<8x128xf32> to vector<8xf32>
    %36 = vector.shape_cast %35 : vector<8xf32> to vector<8x1xf32>
    %cst_15 = arith.constant 8.000000e+00 : f32
    %37 = vector.broadcast %cst_15 : f32 to vector<8x1xf32>
    %38 = arith.divf %33, %37 : vector<8x1xf32>
    %cst_16 = arith.constant 8.000000e+00 : f32
    %39 = vector.broadcast %cst_16 : f32 to vector<8x1xf32>
    %40 = arith.divf %36, %39 : vector<8x1xf32>
    %41 = arith.mulf %38, %38 : vector<8x1xf32>
    %42 = arith.subf %40, %41 : vector<8x1xf32>
    %43 = vector.broadcast %38 : vector<8x1xf32> to vector<8x128xf32>
    %44 = arith.subf %29, %43 : vector<8x128xf32>
    %cst_17 = arith.constant 9.99999974E-6 : f32
    %45 = vector.broadcast %cst_17 : f32 to vector<8x1xf32>
    %46 = arith.addf %42, %45 : vector<8x1xf32>
    %47 = math.rsqrt %46 : vector<8x1xf32>
    %48 = vector.broadcast %47 : vector<8x1xf32> to vector<8x128xf32>
    %49 = arith.mulf %44, %48 : vector<8x128xf32>
    %50 = vector.broadcast %30 : vector<1x128xf32> to vector<8x128xf32>
    %51 = arith.mulf %49, %50 : vector<8x128xf32>
    %52 = vector.broadcast %31 : vector<1x128xf32> to vector<8x128xf32>
    %53 = arith.addf %51, %52 : vector<8x128xf32>
    %cst_18 = arith.constant 0.000000e+00 : f32
    %54 = vector.broadcast %cst_18 : f32 to vector<8x128xf32>
    %55 = arith.maximumf %53, %54 : vector<8x128xf32>
    %56 = arith.truncf %55 : vector<8x128xf32> to vector<8x128xbf16>
    %57 = tpu.concatenate %28, %56 in 1 : vector<8x128xbf16>, vector<8x128xbf16> -> vector<8x256xbf16>
    %c0_19 = arith.constant 0 : index
    %c0_20 = arith.constant 0 : index
    %58 = vector.load %arg4[%c0_19, %c0_20] : memref<256x128xbf16, #tpu.memory_space<vmem>>, vector<256x128xbf16>
    %cst_21 = arith.constant dense<0.000000e+00> : vector<8x128xf32>
    %59 = tpu.matmul %57, %58, %cst_21 {dimension_numbers = #tpu.dot_dimension_numbers<[1], [0], [0], [1], [0, 0, 1, 1], [], []>} : vector<8x256xbf16>, vector<256x128xbf16>, vector<8x128xf32> -> vector<8x128xf32>
    %c0_22 = arith.constant 0 : index
    %c0_23 = arith.constant 0 : index
    %60 = vector.load %arg5[%c0_22, %c0_23] : memref<1x128xf32, #tpu.memory_space<vmem>>, vector<1x128xf32>
    %61 = vector.broadcast %60 : vector<1x128xf32> to vector<8x128xf32>
    %62 = arith.addf %59, %61 : vector<8x128xf32>
    %c0_24 = arith.constant 0 : index
    %c0_25 = arith.constant 0 : index
    %63 = vector.load %arg6[%c0_24, %c0_25] : memref<1x128xf32, #tpu.memory_space<vmem>>, vector<1x128xf32>
    %c0_26 = arith.constant 0 : index
    %c0_27 = arith.constant 0 : index
    %64 = vector.load %arg7[%c0_26, %c0_27] : memref<1x128xf32, #tpu.memory_space<vmem>>, vector<1x128xf32>
    %cst_28 = arith.constant dense<0.000000e+00> : vector<8xf32>
    %65 = vector.multi_reduction <add>, %62, %cst_28 [1] : vector<8x128xf32> to vector<8xf32>
    %66 = vector.shape_cast %65 : vector<8xf32> to vector<8x1xf32>
    %67 = arith.mulf %62, %62 : vector<8x128xf32>
    %cst_29 = arith.constant dense<0.000000e+00> : vector<8xf32>
    %68 = vector.multi_reduction <add>, %67, %cst_29 [1] : vector<8x128xf32> to vector<8xf32>
    %69 = vector.shape_cast %68 : vector<8xf32> to vector<8x1xf32>
    %cst_30 = arith.constant 3.200000e+01 : f32
    %70 = vector.broadcast %cst_30 : f32 to vector<8x1xf32>
    %71 = arith.divf %66, %70 : vector<8x1xf32>
    %cst_31 = arith.constant 3.200000e+01 : f32
    %72 = vector.broadcast %cst_31 : f32 to vector<8x1xf32>
    %73 = arith.divf %69, %72 : vector<8x1xf32>
    %74 = arith.mulf %71, %71 : vector<8x1xf32>
    %75 = arith.subf %73, %74 : vector<8x1xf32>
    %76 = vector.broadcast %71 : vector<8x1xf32> to vector<8x128xf32>
    %77 = arith.subf %62, %76 : vector<8x128xf32>
    %cst_32 = arith.constant 9.99999974E-6 : f32
    %78 = vector.broadcast %cst_32 : f32 to vector<8x1xf32>
    %79 = arith.addf %75, %78 : vector<8x1xf32>
    %80 = math.rsqrt %79 : vector<8x1xf32>
    %81 = vector.broadcast %80 : vector<8x1xf32> to vector<8x128xf32>
    %82 = arith.mulf %77, %81 : vector<8x128xf32>
    %83 = vector.broadcast %63 : vector<1x128xf32> to vector<8x128xf32>
    %84 = arith.mulf %82, %83 : vector<8x128xf32>
    %85 = vector.broadcast %64 : vector<1x128xf32> to vector<8x128xf32>
    %86 = arith.addf %84, %85 : vector<8x128xf32>
    %cst_33 = arith.constant 0.000000e+00 : f32
    %87 = vector.broadcast %cst_33 : f32 to vector<8x128xf32>
    %88 = arith.maximumf %86, %87 : vector<8x128xf32>
    %89 = arith.truncf %88 : vector<8x128xf32> to vector<8x128xbf16>
    %c0_34 = arith.constant 0 : index
    %c0_35 = arith.constant 0 : index
    %90 = vector.load %arg8[%c0_34, %c0_35] : memref<128x256xbf16, #tpu.memory_space<vmem>>, vector<128x256xbf16>
    %cst_36 = arith.constant dense<0.000000e+00> : vector<8x256xf32>
    %91 = tpu.matmul %89, %90, %cst_36 {dimension_numbers = #tpu.dot_dimension_numbers<[1], [0], [0], [1], [0, 0, 1, 1], [], []>} : vector<8x128xbf16>, vector<128x256xbf16>, vector<8x256xf32> -> vector<8x256xf32>
    %c0_37 = arith.constant 0 : index
    %c0_38 = arith.constant 0 : index
    %92 = vector.load %arg9[%c0_37, %c0_38] : memref<1x256xf32, #tpu.memory_space<vmem>>, vector<1x256xf32>
    %93 = vector.broadcast %92 : vector<1x256xf32> to vector<8x256xf32>
    %94 = arith.addf %91, %93 : vector<8x256xf32>
    %95 = vector.extract_strided_slice %0 {offsets = [0, 0], sizes = [8, 128], strides = [1, 1]} : vector<8x256xf32> to vector<8x128xf32>
    %96 = vector.extract_strided_slice %94 {offsets = [0, 0], sizes = [8, 128], strides = [1, 1]} : vector<8x256xf32> to vector<8x128xf32>
    %97 = arith.addf %95, %96 : vector<8x128xf32>
    %c0_39 = arith.constant 0 : index
    %c0_40 = arith.constant 0 : index
    %98 = vector.load %arg10[%c0_39, %c0_40] : memref<8x128xf32, #tpu.memory_space<vmem>>, vector<8x128xf32>
    tpu.vector_store %arg10[%c0_39, %c0_40], %97 {strides = array<i32>} : memref<8x128xf32, #tpu.memory_space<vmem>>, vector<8x128xf32>,
    %99 = vector.extract_strided_slice %94 {offsets = [0, 128], sizes = [8, 128], strides = [1, 1]} : vector<8x256xf32> to vector<8x128xf32>
    %c0_41 = arith.constant 0 : index
    %c0_42 = arith.constant 0 : index
    %100 = vector.load %arg11[%c0_41, %c0_42] : memref<8x128xf32, #tpu.memory_space<vmem>>, vector<8x128xf32>
    tpu.vector_store %arg11[%c0_41, %c0_42], %99 {strides = array<i32>} : memref<8x128xf32, #tpu.memory_space<vmem>>, vector<8x128xf32>,
    return
  }
  func.func @transform_0(%arg0: i32) -> (i32, i32) {
    %c0_i32 = arith.constant 0 : i32
    %c0_i32_0 = arith.constant 0 : i32
    return %arg0, %c0_i32 : i32, i32
  }
  func.func @transform_1(%arg0: i32) -> (i32, i32) {
    %c0_i32 = arith.constant 0 : i32
    %c0_i32_0 = arith.constant 0 : i32
    %c0_i32_1 = arith.constant 0 : i32
    return %c0_i32, %c0_i32_0 : i32, i32
  }
  func.func @transform_2(%arg0: i32) -> (i32, i32) {
    %c0_i32 = arith.constant 0 : i32
    %c0_i32_0 = arith.constant 0 : i32
    %c0_i32_1 = arith.constant 0 : i32
    return %c0_i32, %c0_i32_0 : i32, i32
  }
  func.func @transform_3(%arg0: i32) -> (i32, i32) {
    %c0_i32 = arith.constant 0 : i32
    %c0_i32_0 = arith.constant 0 : i32
    %c0_i32_1 = arith.constant 0 : i32
    return %c0_i32, %c0_i32_0 : i32, i32
  }
  func.func @transform_4(%arg0: i32) -> (i32, i32) {
    %c0_i32 = arith.constant 0 : i32
    %c0_i32_0 = arith.constant 0 : i32
    %c0_i32_1 = arith.constant 0 : i32
    return %c0_i32, %c0_i32_0 : i32, i32
  }
  func.func @transform_5(%arg0: i32) -> (i32, i32) {
    %c0_i32 = arith.constant 0 : i32
    %c0_i32_0 = arith.constant 0 : i32
    %c0_i32_1 = arith.constant 0 : i32
    return %c0_i32, %c0_i32_0 : i32, i32
  }
  func.func @transform_6(%arg0: i32) -> (i32, i32) {
    %c0_i32 = arith.constant 0 : i32
    %c0_i32_0 = arith.constant 0 : i32
    %c0_i32_1 = arith.constant 0 : i32
    return %c0_i32, %c0_i32_0 : i32, i32
  }
  func.func @transform_7(%arg0: i32) -> (i32, i32) {
    %c0_i32 = arith.constant 0 : i32
    %c0_i32_0 = arith.constant 0 : i32
    %c0_i32_1 = arith.constant 0 : i32
    return %c0_i32, %c0_i32_0 : i32, i32
  }
  func.func @transform_8(%arg0: i32) -> (i32, i32) {
    %c0_i32 = arith.constant 0 : i32
    %c0_i32_0 = arith.constant 0 : i32
    %c0_i32_1 = arith.constant 0 : i32
    return %c0_i32, %c0_i32_0 : i32, i32
  }
  func.func @transform_9(%arg0: i32) -> (i32, i32) {
    %c0_i32 = arith.constant 0 : i32
    %c0_i32_0 = arith.constant 0 : i32
    return %arg0, %c0_i32 : i32, i32
  }
  func.func @transform_10(%arg0: i32) -> (i32, i32) {
    %c0_i32 = arith.constant 0 : i32
    %c0_i32_0 = arith.constant 0 : i32
    return %arg0, %c0_i32 : i32, i32
  }
}

</mosaic_0001>

<llo_original>
// kernel: edge_message_passing.3
$region0: #{edge_message_passing.3}
  #allocation0 [shape = 'u32[]', space=smem, size = 0x4, offset = 0x4, fixed_abs, tag = 'smem constant byte address 0x4 - core index']
  #allocation1 [shape = 'u32[72,128]{1,0:T(1,128)}', space=vmem, size = 0x9000, scoped, tag = 'internal scratch']
  %s0 = inlined_call_operand.vmem [shape: f32[16,256], index: 0, kind: input, shape index: {}]
  %s1 = inlined_call_operand.vmem [shape: f32[2,128], index: 1, kind: input, shape index: {}]
  %s2 = inlined_call_operand.vmem [shape: f32[2,128], index: 2, kind: input, shape index: {}]
  %s3 = inlined_call_operand.vmem [shape: bf16[256,128], index: 3, kind: input, shape index: {}]
  %s4 = inlined_call_operand.vmem [shape: f32[1,128], index: 4, kind: input, shape index: {}]
  %s5 = inlined_call_operand.vmem [shape: f32[1,128], index: 5, kind: input, shape index: {}]
  %s6 = inlined_call_operand.vmem [shape: f32[1,128], index: 6, kind: input, shape index: {}]
  %s7 = inlined_call_operand.vmem [shape: bf16[128,256], index: 7, kind: input, shape index: {}]
  %s8 = inlined_call_operand.vmem [shape: f32[1,256], index: 8, kind: input, shape index: {}]
  %s9 = inlined_call_operand.hbm [shape: f32[16,128], index: 9, kind: output, shape index: {0}]
  %s10 = inlined_call_operand.vmem [shape: f32[16,128], index: 10, kind: output, shape index: {1}]
  %11 = xla_tuple %s9, %s10
  %s12 = sld [smem:[#allocation0]]
  $region77: #{edge_message_passing.3} parent=0
    _
  %s14 = ssub.s32 1, %s12
  %s15 = scalar_select 0, %s14, %s12
  $region1: #{edge_message_passing.3} parent=0
    #allocation2 [shape = 'u8[8192]{0}', space=vmem, size = 0x2000, scoped, tag = 'output window, operand 0']
    #allocation3 [shape = 's32[2]{0}', space=sflag, size = 0x8, scoped, tag = 'scoped memory for edge_message_passing.3']
    %16 = vsyncpa [#allocation3], 0
    %s17 = scalar_lea.sflag [#allocation3], 1
    %18 = vsyncpa %s17, 0
    loop: start=0, step=1, limit=4
    $region2: #{edge_message_passing.3} parent=1 // loop_pre_header
      _
    $region3: #{edge_message_passing.3} parent=1 // loop_header
      %s20 = sphi 0, %s24
      %p21 = scmp.ge.s32.totalorder %s20, 4
      %s30 = sphi 0, %s32
      %s33 = sphi 0, %s30
      %s34 = sphi 0, %s33
      %s50 = sphi 0, %s34
      %s54 = sphi 0, %s54
      %s56 = sphi 0, %s54
      %s57 = sphi 0, %s56
      %s71 = sphi 0, %s57
      %s75 = sphi 0, %s75
      %s77 = sphi 0, %s75
      %s78 = sphi 0, %s77
      %s92 = sphi 0, %s78
      %s96 = sphi 0, %s96
      %s98 = sphi 0, %s96
      %s99 = sphi 0, %s98
      %s113 = sphi 0, %s99
      %s117 = sphi 0, %s117
      %s119 = sphi 0, %s117
      %s120 = sphi 0, %s119
      %s134 = sphi 0, %s120
      %s138 = sphi 0, %s138
      %s140 = sphi 0, %s138
      %s141 = sphi 0, %s140
      %s155 = sphi 0, %s141
      %s159 = sphi 0, %s159
      %s161 = sphi 0, %s159
      %s162 = sphi 0, %s161
      %s176 = sphi 0, %s162
      %s180 = sphi 0, %s180
      %s182 = sphi 0, %s180
      %s183 = sphi 0, %s182
      %s197 = sphi 0, %s183
      %s201 = sphi 0, %s201
      %s203 = sphi 0, %s201
      %s204 = sphi 0, %s203
      %s218 = sphi 0, %s204
      %s224 = sphi 0, %s226
      %s227 = sphi 0, %s224
      %s228 = sphi 0, %s227
      %s244 = sphi 0, %s228
      %s250 = sphi 0, %s252
      %s253 = sphi 0, %s250
      %s254 = sphi 0, %s253
      %s270 = sphi 0, %s254
    $region4: #{edge_message_passing.3} parent=1 // loop_header_branch
      %23 = sbr.rel (%p21) target = $region8
    $region5: #{edge_message_passing.3} parent=1 // loop_body
      %s25 = ssub.s32 %s20, 1
      %s26 = ssub.s32 %s20, 2
      %s27 = sadd.s32 %s20, 1
      %s28 = ssub.s32 %s20, %s27
      %p29 = scmp.eq.s32.totalorder %s28, 0
      %s31 = sadd.s32 %s30, 1
      %s32 = scalar_select %p29, %s30, %s31
      %p35 = pneg %p29
      %p36 = scmp.eq.s32.totalorder %s20, 1
      %p37 = por %p35, %p36
      %p38 = scmp.ne.s32.totalorder %s30, %s33
      %p39 = scmp.eq.s32.totalorder %s20, 0
      %p40 = por %p38, %p39
      %p41 = scmp.ne.s32.totalorder %s30, %s33
      %p42 = scmp.eq.s32.totalorder %s25, 1
      %p43 = por %p41, %p42
      %p44 = scmp.ne.s32.totalorder %s33, %s34
      %p45 = scmp.eq.s32.totalorder %s25, 0
      %p46 = por %p44, %p45
      %p47 = scmp.ne.s32.totalorder %s33, %s34
      %p48 = scmp.eq.s32.totalorder %s26, 1
      %p49 = por %p47, %p48
      %p51 = scmp.ne.s32.totalorder %s34, %s50
      %p52 = scmp.eq.s32.totalorder %s26, 0
      %p53 = por %p51, %p52
      %s55 = sadd.s32 %s54, 1
      %p58 = scmp.eq.s32.totalorder %s20, 1
      %p59 = scmp.ne.s32.totalorder %s54, %s56
      %p60 = scmp.eq.s32.totalorder %s20, 0
      %p61 = por %p59, %p60
      %p62 = scmp.ne.s32.totalorder %s54, %s56
      %p63 = scmp.eq.s32.totalorder %s25, 1
      %p64 = por %p62, %p63
      %p65 = scmp.ne.s32.totalorder %s56, %s57
      %p66 = scmp.eq.s32.totalorder %s25, 0
      %p67 = por %p65, %p66
      %p68 = scmp.ne.s32.totalorder %s56, %s57
      %p69 = scmp.eq.s32.totalorder %s26, 1
      %p70 = por %p68, %p69
      %p72 = scmp.ne.s32.totalorder %s57, %s71
      %p73 = scmp.eq.s32.totalorder %s26, 0
      %p74 = por %p72, %p73
      %s76 = sadd.s32 %s75, 1
      %p79 = scmp.eq.s32.totalorder %s20, 1
      %p80 = scmp.ne.s32.totalorder %s75, %s77
      %p81 = scmp.eq.s32.totalorder %s20, 0
      %p82 = por %p80, %p81
      %p83 = scmp.ne.s32.totalorder %s75, %s77
      %p84 = scmp.eq.s32.totalorder %s25, 1
      %p85 = por %p83, %p84
      %p86 = scmp.ne.s32.totalorder %s77, %s78
      %p87 = scmp.eq.s32.totalorder %s25, 0
      %p88 = por %p86, %p87
      %p89 = scmp.ne.s32.totalorder %s77, %s78
      %p90 = scmp.eq.s32.totalorder %s26, 1
      %p91 = por %p89, %p90
      %p93 = scmp.ne.s32.totalorder %s78, %s92
      %p94 = scmp.eq.s32.totalorder %s26, 0
      %p95 = por %p93, %p94
      %s97 = sadd.s32 %s96, 1
      %p100 = scmp.eq.s32.totalorder %s20, 1
      %p101 = scmp.ne.s32.totalorder %s96, %s98
      %p102 = scmp.eq.s32.totalorder %s20, 0
      %p103 = por %p101, %p102
      %p104 = scmp.ne.s32.totalorder %s96, %s98
      %p105 = scmp.eq.s32.totalorder %s25, 1
      %p106 = por %p104, %p105
      %p107 = scmp.ne.s32.totalorder %s98, %s99
      %p108 = scmp.eq.s32.totalorder %s25, 0
      %p109 = por %p107, %p108
      %p110 = scmp.ne.s32.totalorder %s98, %s99
      %p111 = scmp.eq.s32.totalorder %s26, 1
      %p112 = por %p110, %p111
      %p114 = scmp.ne.s32.totalorder %s99, %s113
      %p115 = scmp.eq.s32.totalorder %s26, 0
      %p116 = por %p114, %p115
      %s118 = sadd.s32 %s117, 1
      %p121 = scmp.eq.s32.totalorder %s20, 1
      %p122 = scmp.ne.s32.totalorder %s117, %s119
      %p123 = scmp.eq.s32.totalorder %s20, 0
      %p124 = por %p122, %p123
      %p125 = scmp.ne.s32.totalorder %s117, %s119
      %p126 = scmp.eq.s32.totalorder %s25, 1
      %p127 = por %p125, %p126
      %p128 = scmp.ne.s32.totalorder %s119, %s120
      %p129 = scmp.eq.s32.totalorder %s25, 0
      %p130 = por %p128, %p129
      %p131 = scmp.ne.s32.totalorder %s119, %s120
      %p132 = scmp.eq.s32.totalorder %s26, 1
      %p133 = por %p131, %p132
      %p135 = scmp.ne.s32.totalorder %s120, %s134
      %p136 = scmp.eq.s32.totalorder %s26, 0
      %p137 = por %p135, %p136
      %s139 = sadd.s32 %s138, 1
      %p142 = scmp.eq.s32.totalorder %s20, 1
      %p143 = scmp.ne.s32.totalorder %s138, %s140
      %p144 = scmp.eq.s32.totalorder %s20, 0
      %p145 = por %p143, %p144
      %p146 = scmp.ne.s32.totalorder %s138, %s140
      %p147 = scmp.eq.s32.totalorder %s25, 1
      %p148 = por %p146, %p147
      %p149 = scmp.ne.s32.totalorder %s140, %s141
      %p150 = scmp.eq.s32.totalorder %s25, 0
      %p151 = por %p149, %p150
      %p152 = scmp.ne.s32.totalorder %s140, %s141
      %p153 = scmp.eq.s32.totalorder %s26, 1
      %p154 = por %p152, %p153
      %p156 = scmp.ne.s32.totalorder %s141, %s155
      %p157 = scmp.eq.s32.totalorder %s26, 0
      %p158 = por %p156, %p157
      %s160 = sadd.s32 %s159, 1
      %p163 = scmp.eq.s32.totalorder %s20, 1
      %p164 = scmp.ne.s32.totalorder %s159, %s161
      %p165 = scmp.eq.s32.totalorder %s20, 0
      %p166 = por %p164, %p165
      %p167 = scmp.ne.s32.totalorder %s159, %s161
      %p168 = scmp.eq.s32.totalorder %s25, 1
      %p169 = por %p167, %p168
      %p170 = scmp.ne.s32.totalorder %s161, %s162
      %p171 = scmp.eq.s32.totalorder %s25, 0
      %p172 = por %p170, %p171
      %p173 = scmp.ne.s32.totalorder %s161, %s162
      %p174 = scmp.eq.s32.totalorder %s26, 1
      %p175 = por %p173, %p174
      %p177 = scmp.ne.s32.totalorder %s162, %s176
      %p178 = scmp.eq.s32.totalorder %s26, 0
      %p179 = por %p177, %p178
      %s181 = sadd.s32 %s180, 1
      %p184 = scmp.eq.s32.totalorder %s20, 1
      %p185 = scmp.ne.s32.totalorder %s180, %s182
      %p186 = scmp.eq.s32.totalorder %s20, 0
      %p187 = por %p185, %p186
      %p188 = scmp.ne.s32.totalorder %s180, %s182
      %p189 = scmp.eq.s32.totalorder %s25, 1
      %p190 = por %p188, %p189
      %p191 = scmp.ne.s32.totalorder %s182, %s183
      %p192 = scmp.eq.s32.totalorder %s25, 0
      %p193 = por %p191, %p192
      %p194 = scmp.ne.s32.totalorder %s182, %s183
      %p195 = scmp.eq.s32.totalorder %s26, 1
      %p196 = por %p194, %p195
      %p198 = scmp.ne.s32.totalorder %s183, %s197
      %p199 = scmp.eq.s32.totalorder %s26, 0
      %p200 = por %p198, %p199
      %s202 = sadd.s32 %s201, 1
      %p205 = scmp.eq.s32.totalorder %s20, 1
      %p206 = scmp.ne.s32.totalorder %s201, %s203
      %p207 = scmp.eq.s32.totalorder %s20, 0
      %p208 = por %p206, %p207
      %p209 = scmp.ne.s32.totalorder %s201, %s203
      %p210 = scmp.eq.s32.totalorder %s25, 1
      %p211 = por %p209, %p210
      %p212 = scmp.ne.s32.totalorder %s203, %s204
      %p213 = scmp.eq.s32.totalorder %s25, 0
      %p214 = por %p212, %p213
      %p215 = scmp.ne.s32.totalorder %s203, %s204
      %p216 = scmp.eq.s32.totalorder %s26, 1
      %p217 = por %p215, %p216
      %p219 = scmp.ne.s32.totalorder %s204, %s218
      %p220 = scmp.eq.s32.totalorder %s26, 0
      %p221 = por %p219, %p220
      %s222 = ssub.s32 %s20, %s27
      %p223 = scmp.eq.s32.totalorder %s222, 0
      %s225 = sadd.s32 %s224, 1
      %s226 = scalar_select %p223, %s224, %s225
      %p229 = pneg %p223
      %p230 = scmp.eq.s32.totalorder %s20, 1
      %p231 = por %p229, %p230
      %p232 = scmp.ne.s32.totalorder %s224, %s227
      %p233 = scmp.eq.s32.totalorder %s20, 0
      %p234 = por %p232, %p233
      %p235 = scmp.ne.s32.totalorder %s224, %s227
      %p236 = scmp.eq.s32.totalorder %s25, 1
      %p237 = por %p235, %p236
      %p238 = scmp.ne.s32.totalorder %s227, %s228
      %p239 = scmp.eq.s32.totalorder %s25, 0
      %p240 = por %p238, %p239
      %p241 = scmp.ne.s32.totalorder %s227, %s228
      %p242 = scmp.eq.s32.totalorder %s26, 1
      %p243 = por %p241, %p242
      %p245 = scmp.ne.s32.totalorder %s228, %s244
      %p246 = scmp.eq.s32.totalorder %s26, 0
      %p247 = por %p245, %p246
      %s248 = ssub.s32 %s20, %s27
      %p249 = scmp.eq.s32.totalorder %s248, 0
      %s251 = sadd.s32 %s250, 1
      %s252 = scalar_select %p249, %s250, %s251
      %p255 = pneg %p249
      %p256 = scmp.eq.s32.totalorder %s20, 1
      %p257 = por %p255, %p256
      %p258 = scmp.ne.s32.totalorder %s250, %s253
      %p259 = scmp.eq.s32.totalorder %s20, 0
      %p260 = por %p258, %p259
      %p261 = scmp.ne.s32.totalorder %s250, %s253
      %p262 = scmp.eq.s32.totalorder %s25, 1
      %p263 = por %p261, %p262
      %p264 = scmp.ne.s32.totalorder %s253, %s254
      %p265 = scmp.eq.s32.totalorder %s25, 0
      %p266 = por %p264, %p265
      %p267 = scmp.ne.s32.totalorder %s253, %s254
      %p268 = scmp.eq.s32.totalorder %s26, 1
      %p269 = por %p267, %p268
      %p271 = scmp.ne.s32.totalorder %s254, %s270
      %p272 = scmp.eq.s32.totalorder %s26, 0
      %p273 = por %p271, %p272
      %p274 = scmp.le.s32.totalorder 1, %s20
      %p275 = scmp.lt.s32.totalorder %s20, 3
      %p276 = pnand %p274, %p275
      %p277 = pneg %p276
      // Predicated region
      $region9: #{edge_message_passing.3} parent=5 // pred_check
        _
      $region10: #{edge_message_passing.3} parent=5 // pred_check_branch
        %279 = sbr.rel (%p276) target = $region12
      $region11: #{edge_message_passing.3} parent=5 // pred_region
        %s280 = ssub.s32 %s20, 1
        // Predicated region
        $region13: #{edge_message_passing.3} parent=11 // pred_check
          %p281 = pneg %p67
        $region14: #{edge_message_passing.3} parent=11 // pred_check_branch
          %283 = sbr.rel (%p281) target = $region16
        $region15: #{edge_message_passing.3} parent=11 // pred_region
          _
        $region16: #{edge_message_passing.3} parent=11 // pred_fallthru
          _
        // Predicated region
        $region17: #{edge_message_passing.3} parent=11 // pred_check
          %p284 = pneg %p88
        $region18: #{edge_message_passing.3} parent=11 // pred_check_branch
          %286 = sbr.rel (%p284) target = $region20
        $region19: #{edge_message_passing.3} parent=11 // pred_region
          _
        $region20: #{edge_message_passing.3} parent=11 // pred_fallthru
          _
        // Predicated region
        $region21: #{edge_message_passing.3} parent=11 // pred_check
          %p287 = pneg %p109
        $region22: #{edge_message_passing.3} parent=11 // pred_check_branch
          %289 = sbr.rel (%p287) target = $region24
        $region23: #{edge_message_passing.3} parent=11 // pred_region
          _
        $region24: #{edge_message_passing.3} parent=11 // pred_fallthru
          _
        // Predicated region
        $region25: #{edge_message_passing.3} parent=11 // pred_check
          %p290 = pneg %p130
        $region26: #{edge_message_passing.3} parent=11 // pred_check_branch
          %292 = sbr.rel (%p290) target = $region28
        $region27: #{edge_message_passing.3} parent=11 // pred_region
          _
        $region28: #{edge_message_passing.3} parent=11 // pred_fallthru
          _
        // Predicated region
        $region29: #{edge_message_passing.3} parent=11 // pred_check
          %p293 = pneg %p151
        $region30: #{edge_message_passing.3} parent=11 // pred_check_branch
          %295 = sbr.rel (%p293) target = $region32
        $region31: #{edge_message_passing.3} parent=11 // pred_region
          _
        $region32: #{edge_message_passing.3} parent=11 // pred_fallthru
          _
        // Predicated region
        $region33: #{edge_message_passing.3} parent=11 // pred_check
          %p296 = pneg %p172
        $region34: #{edge_message_passing.3} parent=11 // pred_check_branch
          %298 = sbr.rel (%p296) target = $region36
        $region35: #{edge_message_passing.3} parent=11 // pred_region
          _
        $region36: #{edge_message_passing.3} parent=11 // pred_fallthru
          _
        // Predicated region
        $region37: #{edge_message_passing.3} parent=11 // pred_check
          %p299 = pneg %p193
        $region38: #{edge_message_passing.3} parent=11 // pred_check_branch
          %301 = sbr.rel (%p299) target = $region40
        $region39: #{edge_message_passing.3} parent=11 // pred_region
          _
        $region40: #{edge_message_passing.3} parent=11 // pred_fallthru
          _
        // Predicated region
        $region41: #{edge_message_passing.3} parent=11 // pred_check
          %p302 = pneg %p214
        $region42: #{edge_message_passing.3} parent=11 // pred_check_branch
          %304 = sbr.rel (%p302) target = $region44
        $region43: #{edge_message_passing.3} parent=11 // pred_region
          _
        $region44: #{edge_message_passing.3} parent=11 // pred_fallthru
          _
      $region12: #{edge_message_passing.3} parent=5 // pred_fallthru
        _
      %p305 = scmp.lt.s32.totalorder %s20, 2
      // Predicated region
      $region45: #{edge_message_passing.3} parent=5 // pred_check
        %p306 = pneg %p305
      $region46: #{edge_message_passing.3} parent=5 // pred_check_branch
        %308 = sbr.rel (%p306) target = $region48
      $region47: #{edge_message_passing.3} parent=5 // pred_region
        // Predicated region
        $region49: #{edge_message_passing.3} parent=47 // pred_check
          %p309 = pneg %p40
        $region50: #{edge_message_passing.3} parent=47 // pred_check_branch
          %311 = sbr.rel (%p309) target = $region52
        $region51: #{edge_message_passing.3} parent=47 // pred_region
          %p312 = scmp.lt.s32.totalorder %s20, 1
          %s313 = scalar_select %p312, %s20, 1
          %s314 = smul.addr %s313, 2
          %s315 = smul.addr %s314, 8
          %s316 = scalar_lea.vmem %s0, %s315
        $region52: #{edge_message_passing.3} parent=47 // pred_fallthru
          _
      $region48: #{edge_message_passing.3} parent=5 // pred_fallthru
        _
      %p317 = scmp.le.s32.totalorder 1, %s20
      %p318 = scmp.lt.s32.totalorder %s20, 3
      %p319 = pnand %p317, %p318
      %p320 = pneg %p319
      // Predicated region
      $region53: #{edge_message_passing.3} parent=5 // pred_check
        _
      $region54: #{edge_message_passing.3} parent=5 // pred_check_branch
        %322 = sbr.rel (%p319) target = $region56
      $region55: #{edge_message_passing.3} parent=5 // pred_region
        %s323 = ssub.s32 %s20, 1
        %p324 = scmp.lt.s32.totalorder %s25, 1
        %s325 = scalar_select %p324, %s25, 1
        %s326 = smul.addr %s325, 2
        %s327 = smul.addr %s326, 8
        %s328 = scalar_lea.vmem %s0, %s327
        %p329 = pneg %p46
        %p330 = pneg %p43
        %p331 = pneg %p67
        %p332 = pneg %p64
        %p333 = pneg %p88
        %p334 = pneg %p85
        %p335 = pneg %p109
        %p336 = pneg %p106
        %p337 = pneg %p130
        %p338 = pneg %p127
        %p339 = pneg %p151
        %p340 = pneg %p148
        %p341 = pneg %p172
        %p342 = pneg %p169
        %p343 = pneg %p193
        %p344 = pneg %p190
        %p345 = pneg %p214
        %p346 = pneg %p211
        %p347 = pneg %p240
        %p348 = pneg %p237
        %s349 = sand.u32 %s227, 1
        %s350 = scalar_lea.sflag [#allocation3], %s349
        %s351 = sand.u32 %s227, 1
        %s352 = smul.addr %s351, 8
        %s353 = scalar_lea.vmem [#allocation2], %s352
        %p354 = pneg %p266
        %p355 = pneg %p263
        %p356 = scmp.lt.s32.totalorder %s25, 1
        %s357 = scalar_select %p356, %s25, 1
        %s358 = smul.addr %s357, 8
        %s359 = scalar_lea.vmem %s10, %s358
        %p360 = scmp.lt.s32.totalorder %s25, 1
        %s361 = scalar_select %p360, %s25, 1
        %s362 = smul.addr %s361, 2
        %s363 = smul.addr %s362, 8
        %s364 = scalar_lea.vmem %s0, %s363
        %p365 = scmp.lt.s32.totalorder %s25, 1
        %s366 = scalar_select %p365, %s25, 1
        %s367 = smul.addr %s366, 8
        %s368 = scalar_lea.vmem %s10, %s367
        %v369 = vld [vmem:[%s364] sm:$0xff]
        %v370 = vld [vmem:[%s364 + $0x8] sm:$0xff]
        %v371 = vld [vmem:[%s1] sm:$0x1]
        %v372 = vld [vmem:[%s2] sm:$0x1]
        %373 = vadd.xlane.f32.xlu0 %v369
        %v374 = vpop.xlane.xlu0 %373
        %v375 = vmul.f32 %v369, %v369
        %376 = vadd.xlane.f32.xlu0 %v375
        %v377 = vpop.xlane.xlu0 %376
        %v378 = vrcp.pop 16.0
        %v379 = vmul.f32 16.0, %v378
        %v380 = vsub.f32 1.0, %v379
        %v381 = vmul.f32 %v378, %v380
        %v382 = vadd.f32 %v378, %v381
        %vm383 = vweird.f32 %v378
        %v384 = vsel %vm383, %v378, %v382
        %v385 = vmul.f32 %v374, %v384
        %v386 = vmul.f32 %v377, %v384
        %v387 = vmul.f32 %v385, %v385
        %v388 = vsub.f32 %v386, %v387
        %v389 = vsub.f32 %v369, %v385
        %v390 = vadd.f32 %v388, 1e-05
        %v391 = vrsqrt.pop %v390
        %v392 = vmul.f32 %v391, %v390
        %v393 = vmul.f32 %v392, %v391
        %v394 = vmul.f32 0.5, %v393
        %v395 = vsub.f32 1.5, %v394
        %v396 = vmul.f32 %v391, %v395
        %vm397 = vweird.f32 %v390
        %vm398 = vweird.f32 %v391
        %vm399 = vmor %vm397, %vm398
        %v400 = vsel %vm399, %v391, %v396
        %v401 = vmul.f32 %v389, %v400
        %v402 = vperm.slane %v371, 0
        %v403 = vmul.f32 %v401, %v402
        %v404 = vperm.slane %v372, 0
        %v405 = vadd.f32 %v403, %v404
        %v406 = vmax.f32 %v405, 0.0
        %v407 = vpack.c.bf16 %v406, %v406
        %v408 = vld [vmem:[%s1 + $0x1] sm:$0x1]
        %v409 = vld [vmem:[%s2 + $0x1] sm:$0x1]
        %410 = vadd.xlane.f32.xlu0 %v370
        %v411 = vpop.xlane.xlu0 %410
        %v412 = vmul.f32 %v370, %v370
        %413 = vadd.xlane.f32.xlu0 %v412
        %v414 = vpop.xlane.xlu0 %413
        %v415 = vrcp.pop 8.0
        %v416 = vmul.f32 8.0, %v415
        %v417 = vsub.f32 1.0, %v416
        %v418 = vmul.f32 %v415, %v417
        %v419 = vadd.f32 %v415, %v418
        %vm420 = vweird.f32 %v415
        %v421 = vsel %vm420, %v415, %v419
        %v422 = vmul.f32 %v411, %v421
        %v423 = vmul.f32 %v414, %v421
        %v424 = vmul.f32 %v422, %v422
        %v425 = vsub.f32 %v423, %v424
        %v426 = vsub.f32 %v370, %v422
        %v427 = vadd.f32 %v425, 1e-05
        %v428 = vrsqrt.pop %v427
        %v429 = vmul.f32 %v428, %v427
        %v430 = vmul.f32 %v429, %v428
        %v431 = vmul.f32 0.5, %v430
        %v432 = vsub.f32 1.5, %v431
        %v433 = vmul.f32 %v428, %v432
        %vm434 = vweird.f32 %v427
        %vm435 = vweird.f32 %v428
        %vm436 = vmor %vm434, %vm435
        %v437 = vsel %vm436, %v428, %v433
        %v438 = vmul.f32 %v426, %v437
        %v439 = vperm.slane %v408, 0
        %v440 = vmul.f32 %v438, %v439
        %v441 = vperm.slane %v409, 0
        %v442 = vadd.f32 %v440, %v441
        %v443 = vmax.f32 %v442, 0.0
        %v444 = vpack.c.bf16 %v443, %v443
        %v445 = vld [vmem:[%s3] sm:$0xf]
        %v446 = vld [vmem:[%s3 + $0x4] sm:$0xf]
        %v447 = vld [vmem:[%s3 + $0x8] sm:$0xf]
        %v448 = vld [vmem:[%s3 + $0xc] sm:$0xf]
        %v449 = vld [vmem:[%s3 + $0x10] sm:$0xf]
        %v450 = vld [vmem:[%s3 + $0x14] sm:$0xf]
        %v451 = vld [vmem:[%s3 + $0x18] sm:$0xf]
        %v452 = vld [vmem:[%s3 + $0x1c] sm:$0xf]
        %v453 = vld [vmem:[%s3 + $0x20] sm:$0xf]
        %v454 = vld [vmem:[%s3 + $0x24] sm:$0xf]
        %v455 = vld [vmem:[%s3 + $0x28] sm:$0xf]
        %v456 = vld [vmem:[%s3 + $0x2c] sm:$0xf]
        %v457 = vld [vmem:[%s3 + $0x30] sm:$0xf]
        %v458 = vld [vmem:[%s3 + $0x34] sm:$0xf]
        %v459 = vld [vmem:[%s3 + $0x38] sm:$0xf]
        %v460 = vld [vmem:[%s3 + $0x3c] sm:$0xf]
        %v461 = vld [vmem:[%s3 + $0x40] sm:$0xf]
        %v462 = vld [vmem:[%s3 + $0x44] sm:$0xf]
        %v463 = vld [vmem:[%s3 + $0x48] sm:$0xf]
        %v464 = vld [vmem:[%s3 + $0x4c] sm:$0xf]
        %v465 = vld [vmem:[%s3 + $0x50] sm:$0xf]
        %v466 = vld [vmem:[%s3 + $0x54] sm:$0xf]
        %v467 = vld [vmem:[%s3 + $0x58] sm:$0xf]
        %v468 = vld [vmem:[%s3 + $0x5c] sm:$0xf]
        %v469 = vld [vmem:[%s3 + $0x60] sm:$0xf]
        %v470 = vld [vmem:[%s3 + $0x64] sm:$0xf]
        %v471 = vld [vmem:[%s3 + $0x68] sm:$0xf]
        %v472 = vld [vmem:[%s3 + $0x6c] sm:$0xf]
        %v473 = vld [vmem:[%s3 + $0x70] sm:$0xf]
        %v474 = vld [vmem:[%s3 + $0x74] sm:$0xf]
        %v475 = vld [vmem:[%s3 + $0x78] sm:$0xf]
        %v476 = vld [vmem:[%s3 + $0x7c] sm:$0xf]
        %v477 = vld [vmem:[%s4] sm:$0x1]
        %v479 = vperm.slane %v477, 0
        %v513 = vunpack.c.l.b16 %v445
        %v514 = vunpack.c.l.b16 %v446
        %v515 = vunpack.c.l.b16 %v447
        %v516 = vunpack.c.l.b16 %v448
        %v517 = vunpack.c.l.b16 %v449
        %v518 = vunpack.c.l.b16 %v450
        %v519 = vunpack.c.l.b16 %v451
        %v520 = vunpack.c.l.b16 %v452
        %v521 = vunpack.c.l.b16 %v453
        %v522 = vunpack.c.l.b16 %v454
        %v523 = vunpack.c.l.b16 %v455
        %v524 = vunpack.c.l.b16 %v456
        %v525 = vunpack.c.l.b16 %v457
        %v526 = vunpack.c.l.b16 %v458
        %v527 = vunpack.c.l.b16 %v459
        %v528 = vunpack.c.l.b16 %v460
        %v529 = vunpack.c.l.b16 %v461
        %v530 = vunpack.c.l.b16 %v462
        %v531 = vunpack.c.l.b16 %v463
        %v532 = vunpack.c.l.b16 %v464
        %v533 = vunpack.c.l.b16 %v465
        %v534 = vunpack.c.l.b16 %v466
        %v535 = vunpack.c.l.b16 %v467
        %v536 = vunpack.c.l.b16 %v468
        %v537 = vunpack.c.l.b16 %v469
        %v538 = vunpack.c.l.b16 %v470
        %v539 = vunpack.c.l.b16 %v471
        %v540 = vunpack.c.l.b16 %v472
        %v541 = vunpack.c.l.b16 %v473
        %v542 = vunpack.c.l.b16 %v474
        %v543 = vunpack.c.l.b16 %v475
        %v544 = vunpack.c.l.b16 %v476
        %v545 = vpack.c.b16 %v514, %v513
        %v546 = vpack.c.b16 %v516, %v515
        %v547 = vpack.c.b16 %v518, %v517
        %v548 = vpack.c.b16 %v520, %v519
        %v549 = vpack.c.b16 %v522, %v521
        %v550 = vpack.c.b16 %v524, %v523
        %v551 = vpack.c.b16 %v526, %v525
        %v552 = vpack.c.b16 %v528, %v527
        %v553 = vpack.c.b16 %v530, %v529
        %v554 = vpack.c.b16 %v532, %v531
        %v555 = vpack.c.b16 %v534, %v533
        %v556 = vpack.c.b16 %v536, %v535
        %v557 = vpack.c.b16 %v538, %v537
        %v558 = vpack.c.b16 %v540, %v539
        %v559 = vpack.c.b16 %v542, %v541
        %v560 = vpack.c.b16 %v544, %v543
        %577 = vmatpush.bf16.msra.mxu0 %v552
        %578 = vmatpush.bf16.msra.mxu0 %v551
        %579 = vmatpush.bf16.msra.mxu0 %v550
        %580 = vmatpush.bf16.msra.mxu0 %v549
        %581 = vmatpush.bf16.msra.mxu0 %v548
        %582 = vmatpush.bf16.msra.mxu0 %v547
        %583 = vmatpush.bf16.msra.mxu0 %v546
        %584 = vmatpush.bf16.msra.mxu0 %v545
        %585 = vmatmul.bf16.gmra.mxu0 %v407
        %v586 = vpop.f32.mrf.mxu0
        %v587 = vadd.f32 %v479, %v586
        %v588 = vpop.f32.mrf.mxu0
        %589 = vdwg.mxu0
        %590 = vmatpush.bf16.msra.mxu0 %v560
        %591 = vmatpush.bf16.msra.mxu0 %v559
        %592 = vmatpush.bf16.msra.mxu0 %v558
        %593 = vmatpush.bf16.msra.mxu0 %v557
        %594 = vmatpush.bf16.msra.mxu0 %v556
        %595 = vmatpush.bf16.msra.mxu0 %v555
        %596 = vmatpush.bf16.msra.mxu0 %v554
        %597 = vmatpush.bf16.msra.mxu0 %v553
        %598 = vmatmul.bf16.gmra.mxu0 %v444
        %v599 = vpop.f32.mrf.mxu0
        %v600 = vadd.f32 %v587, %v599
        %v601 = vpop.f32.mrf.mxu0
        %602 = vdwg.mxu0
        %v603 = vld [vmem:[%s5] sm:$0x1]
        %v604 = vld [vmem:[%s6] sm:$0x1]
        %605 = vadd.xlane.f32.xlu0 %v600
        %v606 = vpop.xlane.xlu0 %605
        %v607 = vmul.f32 %v600, %v600
        %608 = vadd.xlane.f32.xlu0 %v607
        %v609 = vpop.xlane.xlu0 %608
        %v610 = vrcp.pop 32.0
        %v611 = vmul.f32 32.0, %v610
        %v612 = vsub.f32 1.0, %v611
        %v613 = vmul.f32 %v610, %v612
        %v614 = vadd.f32 %v610, %v613
        %vm615 = vweird.f32 %v610
        %v616 = vsel %vm615, %v610, %v614
        %v617 = vmul.f32 %v606, %v616
        %v618 = vmul.f32 %v609, %v616
        %v619 = vmul.f32 %v617, %v617
        %v620 = vsub.f32 %v618, %v619
        %v621 = vsub.f32 %v600, %v617
        %v622 = vadd.f32 %v620, 1e-05
        %v623 = vrsqrt.pop %v622
        %v624 = vmul.f32 %v623, %v622
        %v625 = vmul.f32 %v624, %v623
        %v626 = vmul.f32 0.5, %v625
        %v627 = vsub.f32 1.5, %v626
        %v628 = vmul.f32 %v623, %v627
        %vm629 = vweird.f32 %v622
        %vm630 = vweird.f32 %v623
        %vm631 = vmor %vm629, %vm630
        %v632 = vsel %vm631, %v623, %v628
        %v633 = vmul.f32 %v621, %v632
        %v635 = vperm.slane %v603, 0
        %v637 = vmul.f32 %v633, %v635
        %v639 = vperm.slane %v604, 0
        %v641 = vadd.f32 %v637, %v639
        %v642 = vmax.f32 %v641, 0.0
        %v643 = vpack.c.bf16 %v642, %v642
        %v644 = vld [vmem:[%s7] sm:$0xff]
        %v645 = vld [vmem:[%s7 + $0x8] sm:$0xff]
        %v646 = vld [vmem:[%s7 + $0x10] sm:$0xff]
        %v647 = vld [vmem:[%s7 + $0x18] sm:$0xff]
        %v648 = vld [vmem:[%s7 + $0x20] sm:$0xff]
        %v649 = vld [vmem:[%s7 + $0x28] sm:$0xff]
        %v650 = vld [vmem:[%s7 + $0x30] sm:$0xff]
        %v651 = vld [vmem:[%s7 + $0x38] sm:$0xff]
        %v652 = vld [vmem:[%s7 + $0x40] sm:$0xff]
        %v653 = vld [vmem:[%s7 + $0x48] sm:$0xff]
        %v654 = vld [vmem:[%s7 + $0x50] sm:$0xff]
        %v655 = vld [vmem:[%s7 + $0x58] sm:$0xff]
        %v656 = vld [vmem:[%s7 + $0x60] sm:$0xff]
        %v657 = vld [vmem:[%s7 + $0x68] sm:$0xff]
        %v658 = vld [vmem:[%s7 + $0x70] sm:$0xff]
        %v659 = vld [vmem:[%s7 + $0x78] sm:$0xff]
        %v660 = vld [vmem:[%s8] sm:$0x3]
        %v662 = vperm.slane %v660, 0
        %v663 = vperm.slane %v660, 1
        %v682 = vunpack.c.l.b16 %v644
        %v683 = vunpack.c.h.b16 %v644
        %v684 = vunpack.c.l.b16 %v645
        %v685 = vunpack.c.h.b16 %v645
        %v686 = vunpack.c.l.b16 %v646
        %v687 = vunpack.c.h.b16 %v646
        %v688 = vunpack.c.l.b16 %v647
        %v689 = vunpack.c.h.b16 %v647
        %v690 = vunpack.c.l.b16 %v648
        %v691 = vunpack.c.h.b16 %v648
        %v692 = vunpack.c.l.b16 %v649
        %v693 = vunpack.c.h.b16 %v649
        %v694 = vunpack.c.l.b16 %v650
        %v695 = vunpack.c.h.b16 %v650
        %v696 = vunpack.c.l.b16 %v651
        %v697 = vunpack.c.h.b16 %v651
        %v698 = vunpack.c.l.b16 %v652
        %v699 = vunpack.c.h.b16 %v652
        %v700 = vunpack.c.l.b16 %v653
        %v701 = vunpack.c.h.b16 %v653
        %v702 = vunpack.c.l.b16 %v654
        %v703 = vunpack.c.h.b16 %v654
        %v704 = vunpack.c.l.b16 %v655
        %v705 = vunpack.c.h.b16 %v655
        %v706 = vunpack.c.l.b16 %v656
        %v707 = vunpack.c.h.b16 %v656
        %v708 = vunpack.c.l.b16 %v657
        %v709 = vunpack.c.h.b16 %v657
        %v710 = vunpack.c.l.b16 %v658
        %v711 = vunpack.c.h.b16 %v658
        %v712 = vunpack.c.l.b16 %v659
        %v713 = vunpack.c.h.b16 %v659
        %v714 = vpack.c.b16 %v684, %v682
        %v715 = vpack.c.b16 %v685, %v683
        %v716 = vpack.c.b16 %v688, %v686
        %v717 = vpack.c.b16 %v689, %v687
        %v718 = vpack.c.b16 %v692, %v690
        %v719 = vpack.c.b16 %v693, %v691
        %v720 = vpack.c.b16 %v696, %v694
        %v721 = vpack.c.b16 %v697, %v695
        %v722 = vpack.c.b16 %v700, %v698
        %v723 = vpack.c.b16 %v701, %v699
        %v724 = vpack.c.b16 %v704, %v702
        %v725 = vpack.c.b16 %v705, %v703
        %v726 = vpack.c.b16 %v708, %v706
        %v727 = vpack.c.b16 %v709, %v707
        %v728 = vpack.c.b16 %v712, %v710
        %v729 = vpack.c.b16 %v713, %v711
        %746 = vmatpush.bf16.msra.mxu0 %v728
        %747 = vmatpush.bf16.msra.mxu0 %v726
        %748 = vmatpush.bf16.msra.mxu0 %v724
        %749 = vmatpush.bf16.msra.mxu0 %v722
        %750 = vmatpush.bf16.msra.mxu0 %v720
        %751 = vmatpush.bf16.msra.mxu0 %v718
        %752 = vmatpush.bf16.msra.mxu0 %v716
        %753 = vmatpush.bf16.msra.mxu0 %v714
        %754 = vmatmul.bf16.gmra.mxu0 %v643
        %v755 = vpop.f32.mrf.mxu0
        %v756 = vadd.f32 %v662, %v755
        %v757 = vpop.f32.mrf.mxu0
        %758 = vdwg.mxu0
        %759 = vmatpush.bf16.msra.mxu0 %v729
        %760 = vmatpush.bf16.msra.mxu0 %v727
        %761 = vmatpush.bf16.msra.mxu0 %v725
        %762 = vmatpush.bf16.msra.mxu0 %v723
        %763 = vmatpush.bf16.msra.mxu0 %v721
        %764 = vmatpush.bf16.msra.mxu0 %v719
        %765 = vmatpush.bf16.msra.mxu0 %v717
        %766 = vmatpush.bf16.msra.mxu0 %v715
        %767 = vmatmul.bf16.gmra.mxu0 %v643
        %v768 = vpop.f32.mrf.mxu0
        %v769 = vadd.f32 %v663, %v768
        %v770 = vpop.f32.mrf.mxu0
        %771 = vdwg.mxu0
        %v772 = vadd.f32 %v369, %v756
        %773 = vst [vmem:[%s353] sm:$0xff] %v772
        %774 = vst [vmem:[%s368] sm:$0xff] %v769
        %s775 = sand.u32 %s227, 1
        %s776 = scalar_lea.sflag [#allocation3], %s775
        %s777 = sand.u32 %s227, 1
        %s778 = smul.addr %s777, 8
        %s779 = scalar_lea.vmem [#allocation2], %s778
        %p780 = scmp.lt.s32.totalorder %s25, 1
        %s781 = scalar_select %p780, %s25, 1
        %s782 = smul.addr %s781, 8
        %s783 = scalar_lea.vmem %s10, %s782
        // Predicated region
        $region57: #{edge_message_passing.3} parent=55 // pred_check
          %p784 = pneg %p237
        $region58: #{edge_message_passing.3} parent=55 // pred_check_branch
          %786 = sbr.rel (%p784) target = $region60
        $region59: #{edge_message_passing.3} parent=55 // pred_region
          %788 = vsyncadd %s776, 0
          %s789 = smul.addr %s25, 8
          %s790 = scalar_lea.hbm %s9, %s789
          %s792 = sshll.u32 %s779, 4
          %s793 = int_to_ptr.vmem [resolvable:$true] %s792
          %s794 = sshll.u32 %s790, 4
          %s795 = int_to_ptr.hbm [resolvable:$true] %s794
          %797 = dma.vmem_to_hbm [thread:$0]  %s793, 128, %s795, %s776
        $region60: #{edge_message_passing.3} parent=55 // pred_fallthru
          _
        // Predicated region
        $region61: #{edge_message_passing.3} parent=55 // pred_check
          %p798 = pneg %p263
        $region62: #{edge_message_passing.3} parent=55 // pred_check_branch
          %800 = sbr.rel (%p798) target = $region64
        $region63: #{edge_message_passing.3} parent=55 // pred_region
          _
        $region64: #{edge_message_passing.3} parent=55 // pred_fallthru
          _
      $region56: #{edge_message_passing.3} parent=5 // pred_fallthru
        _
      %p801 = scmp.le.s32.totalorder 2, %s20
      // Predicated region
      $region65: #{edge_message_passing.3} parent=5 // pred_check
        %p802 = pneg %p801
      $region66: #{edge_message_passing.3} parent=5 // pred_check_branch
        %804 = sbr.rel (%p802) target = $region68
      $region67: #{edge_message_passing.3} parent=5 // pred_region
        %s805 = ssub.s32 %s20, 2
        // Predicated region
        $region69: #{edge_message_passing.3} parent=67 // pred_check
          %p806 = pneg %p243
        $region70: #{edge_message_passing.3} parent=67 // pred_check_branch
          %808 = sbr.rel (%p806) target = $region72
        $region71: #{edge_message_passing.3} parent=67 // pred_region
          %s809 = sand.u32 %s228, 1
          %s810 = scalar_lea.sflag [#allocation3], %s809
          %s811 = sand.u32 %s228, 1
          %s812 = smul.addr %s811, 8
          %s813 = scalar_lea.vmem [#allocation2], %s812
          %815 = dma.done %s810, 128
        $region72: #{edge_message_passing.3} parent=67 // pred_fallthru
          _
        // Predicated region
        $region73: #{edge_message_passing.3} parent=67 // pred_check
          %p816 = pneg %p269
        $region74: #{edge_message_passing.3} parent=67 // pred_check_branch
          %818 = sbr.rel (%p816) target = $region76
        $region75: #{edge_message_passing.3} parent=67 // pred_region
          %p819 = scmp.lt.s32.totalorder %s26, 1
          %s820 = scalar_select %p819, %s26, 1
          %s821 = smul.addr %s820, 8
          %s822 = scalar_lea.vmem %s10, %s821
        $region76: #{edge_message_passing.3} parent=67 // pred_fallthru
          _
      $region68: #{edge_message_passing.3} parent=5 // pred_fallthru
        _
    $region6: #{edge_message_passing.3} parent=1 // loop_footer
      %s24 = sadd.s32 1, %s20
    $region7: #{edge_message_passing.3} parent=1 // loop_footer_branch
      %19 = sbr.rel target = $region3
    $region8: #{edge_message_passing.3} parent=1 // loop_exit
      _
    %823 = vsyncpa [#allocation3], 1
    %s824 = scalar_lea.sflag [#allocation3], 1
    %825 = vsyncpa %s824, 1

// kernel: edge_message_passing.2
$region0: #{edge_message_passing.2}
  #allocation0 [shape = 'u32[]', space=smem, size = 0x4, offset = 0x4, fixed_abs, tag = 'smem constant byte address 0x4 - core index']
  #allocation1 [shape = 'u32[72,128]{1,0:T(1,128)}', space=vmem, size = 0x9000, scoped, tag = 'internal scratch']
  %s0 = inlined_call_operand.vmem [shape: f32[32,512], index: 0, kind: input, shape index: {}]
  %s1 = inlined_call_operand.vmem [shape: f32[4,128], index: 1, kind: input, shape index: {}]
  %s2 = inlined_call_operand.vmem [shape: f32[4,128], index: 2, kind: input, shape index: {}]
  %s3 = inlined_call_operand.vmem [shape: bf16[512,128], index: 3, kind: input, shape index: {}]
  %s4 = inlined_call_operand.vmem [shape: f32[1,128], index: 4, kind: input, shape index: {}]
  %s5 = inlined_call_operand.vmem [shape: f32[1,128], index: 5, kind: input, shape index: {}]
  %s6 = inlined_call_operand.vmem [shape: f32[1,128], index: 6, kind: input, shape index: {}]
  %s7 = inlined_call_operand.vmem [shape: bf16[128,128], index: 7, kind: input, shape index: {}]
  %s8 = inlined_call_operand.vmem [shape: f32[1,128], index: 8, kind: input, shape index: {}]
  %s9 = inlined_call_operand.vmem [shape: f32[32,128], index: 9, kind: output, shape index: {}]
  %s10 = sld [smem:[#allocation0]]
  $region69: #{edge_message_passing.2} parent=0
    _
  %s12 = ssub.s32 1, %s10
  %s13 = scalar_select 0, %s12, %s10
  loop: start=0, step=1, limit=4
  $region2: #{edge_message_passing.2} parent=0 // loop_pre_header
    _
  $region3: #{edge_message_passing.2} parent=0 // loop_header
    %s15 = sphi 0, %s19
    %p16 = scmp.ge.s32.totalorder %s15, 4
    %s25 = sphi 0, %s27
    %s28 = sphi 0, %s25
    %s29 = sphi 0, %s28
    %s45 = sphi 0, %s29
    %s49 = sphi 0, %s49
    %s51 = sphi 0, %s49
    %s52 = sphi 0, %s51
    %s66 = sphi 0, %s52
    %s70 = sphi 0, %s70
    %s72 = sphi 0, %s70
    %s73 = sphi 0, %s72
    %s87 = sphi 0, %s73
    %s91 = sphi 0, %s91
    %s93 = sphi 0, %s91
    %s94 = sphi 0, %s93
    %s108 = sphi 0, %s94
    %s112 = sphi 0, %s112
    %s114 = sphi 0, %s112
    %s115 = sphi 0, %s114
    %s129 = sphi 0, %s115
    %s133 = sphi 0, %s133
    %s135 = sphi 0, %s133
    %s136 = sphi 0, %s135
    %s150 = sphi 0, %s136
    %s154 = sphi 0, %s154
    %s156 = sphi 0, %s154
    %s157 = sphi 0, %s156
    %s171 = sphi 0, %s157
    %s175 = sphi 0, %s175
    %s177 = sphi 0, %s175
    %s178 = sphi 0, %s177
    %s192 = sphi 0, %s178
    %s196 = sphi 0, %s196
    %s198 = sphi 0, %s196
    %s199 = sphi 0, %s198
    %s213 = sphi 0, %s199
    %s219 = sphi 0, %s221
    %s222 = sphi 0, %s219
    %s223 = sphi 0, %s222
    %s239 = sphi 0, %s223
  $region4: #{edge_message_passing.2} parent=0 // loop_header_branch
    %18 = sbr.rel (%p16) target = $region8
  $region5: #{edge_message_passing.2} parent=0 // loop_body
    %s20 = ssub.s32 %s15, 1
    %s21 = ssub.s32 %s15, 2
    %s22 = sadd.s32 %s15, 1
    %s23 = ssub.s32 %s15, %s22
    %p24 = scmp.eq.s32.totalorder %s23, 0
    %s26 = sadd.s32 %s25, 1
    %s27 = scalar_select %p24, %s25, %s26
    %p30 = pneg %p24
    %p31 = scmp.eq.s32.totalorder %s15, 1
    %p32 = por %p30, %p31
    %p33 = scmp.ne.s32.totalorder %s25, %s28
    %p34 = scmp.eq.s32.totalorder %s15, 0
    %p35 = por %p33, %p34
    %p36 = scmp.ne.s32.totalorder %s25, %s28
    %p37 = scmp.eq.s32.totalorder %s20, 1
    %p38 = por %p36, %p37
    %p39 = scmp.ne.s32.totalorder %s28, %s29
    %p40 = scmp.eq.s32.totalorder %s20, 0
    %p41 = por %p39, %p40
    %p42 = scmp.ne.s32.totalorder %s28, %s29
    %p43 = scmp.eq.s32.totalorder %s21, 1
    %p44 = por %p42, %p43
    %p46 = scmp.ne.s32.totalorder %s29, %s45
    %p47 = scmp.eq.s32.totalorder %s21, 0
    %p48 = por %p46, %p47
    %s50 = sadd.s32 %s49, 1
    %p53 = scmp.eq.s32.totalorder %s15, 1
    %p54 = scmp.ne.s32.totalorder %s49, %s51
    %p55 = scmp.eq.s32.totalorder %s15, 0
    %p56 = por %p54, %p55
    %p57 = scmp.ne.s32.totalorder %s49, %s51
    %p58 = scmp.eq.s32.totalorder %s20, 1
    %p59 = por %p57, %p58
    %p60 = scmp.ne.s32.totalorder %s51, %s52
    %p61 = scmp.eq.s32.totalorder %s20, 0
    %p62 = por %p60, %p61
    %p63 = scmp.ne.s32.totalorder %s51, %s52
    %p64 = scmp.eq.s32.totalorder %s21, 1
    %p65 = por %p63, %p64
    %p67 = scmp.ne.s32.totalorder %s52, %s66
    %p68 = scmp.eq.s32.totalorder %s21, 0
    %p69 = por %p67, %p68
    %s71 = sadd.s32 %s70, 1
    %p74 = scmp.eq.s32.totalorder %s15, 1
    %p75 = scmp.ne.s32.totalorder %s70, %s72
    %p76 = scmp.eq.s32.totalorder %s15, 0
    %p77 = por %p75, %p76
    %p78 = scmp.ne.s32.totalorder %s70, %s72
    %p79 = scmp.eq.s32.totalorder %s20, 1
    %p80 = por %p78, %p79
    %p81 = scmp.ne.s32.totalorder %s72, %s73
    %p82 = scmp.eq.s32.totalorder %s20, 0
    %p83 = por %p81, %p82
    %p84 = scmp.ne.s32.totalorder %s72, %s73
    %p85 = scmp.eq.s32.totalorder %s21, 1
    %p86 = por %p84, %p85
    %p88 = scmp.ne.s32.totalorder %s73, %s87
    %p89 = scmp.eq.s32.totalorder %s21, 0
    %p90 = por %p88, %p89
    %s92 = sadd.s32 %s91, 1
    %p95 = scmp.eq.s32.totalorder %s15, 1
    %p96 = scmp.ne.s32.totalorder %s91, %s93
    %p97 = scmp.eq.s32.totalorder %s15, 0
    %p98 = por %p96, %p97
    %p99 = scmp.ne.s32.totalorder %s91, %s93
    %p100 = scmp.eq.s32.totalorder %s20, 1
    %p101 = por %p99, %p100
    %p102 = scmp.ne.s32.totalorder %s93, %s94
    %p103 = scmp.eq.s32.totalorder %s20, 0
    %p104 = por %p102, %p103
    %p105 = scmp.ne.s32.totalorder %s93, %s94
    %p106 = scmp.eq.s32.totalorder %s21, 1
    %p107 = por %p105, %p106
    %p109 = scmp.ne.s32.totalorder %s94, %s108
    %p110 = scmp.eq.s32.totalorder %s21, 0
    %p111 = por %p109, %p110
    %s113 = sadd.s32 %s112, 1
    %p116 = scmp.eq.s32.totalorder %s15, 1
    %p117 = scmp.ne.s32.totalorder %s112, %s114
    %p118 = scmp.eq.s32.totalorder %s15, 0
    %p119 = por %p117, %p118
    %p120 = scmp.ne.s32.totalorder %s112, %s114
    %p121 = scmp.eq.s32.totalorder %s20, 1
    %p122 = por %p120, %p121
    %p123 = scmp.ne.s32.totalorder %s114, %s115
    %p124 = scmp.eq.s32.totalorder %s20, 0
    %p125 = por %p123, %p124
    %p126 = scmp.ne.s32.totalorder %s114, %s115
    %p127 = scmp.eq.s32.totalorder %s21, 1
    %p128 = por %p126, %p127
    %p130 = scmp.ne.s32.totalorder %s115, %s129
    %p131 = scmp.eq.s32.totalorder %s21, 0
    %p132 = por %p130, %p131
    %s134 = sadd.s32 %s133, 1
    %p137 = scmp.eq.s32.totalorder %s15, 1
    %p138 = scmp.ne.s32.totalorder %s133, %s135
    %p139 = scmp.eq.s32.totalorder %s15, 0
    %p140 = por %p138, %p139
    %p141 = scmp.ne.s32.totalorder %s133, %s135
    %p142 = scmp.eq.s32.totalorder %s20, 1
    %p143 = por %p141, %p142
    %p144 = scmp.ne.s32.totalorder %s135, %s136
    %p145 = scmp.eq.s32.totalorder %s20, 0
    %p146 = por %p144, %p145
    %p147 = scmp.ne.s32.totalorder %s135, %s136
    %p148 = scmp.eq.s32.totalorder %s21, 1
    %p149 = por %p147, %p148
    %p151 = scmp.ne.s32.totalorder %s136, %s150
    %p152 = scmp.eq.s32.totalorder %s21, 0
    %p153 = por %p151, %p152
    %s155 = sadd.s32 %s154, 1
    %p158 = scmp.eq.s32.totalorder %s15, 1
    %p159 = scmp.ne.s32.totalorder %s154, %s156
    %p160 = scmp.eq.s32.totalorder %s15, 0
    %p161 = por %p159, %p160
    %p162 = scmp.ne.s32.totalorder %s154, %s156
    %p163 = scmp.eq.s32.totalorder %s20, 1
    %p164 = por %p162, %p163
    %p165 = scmp.ne.s32.totalorder %s156, %s157
    %p166 = scmp.eq.s32.totalorder %s20, 0
    %p167 = por %p165, %p166
    %p168 = scmp.ne.s32.totalorder %s156, %s157
    %p169 = scmp.eq.s32.totalorder %s21, 1
    %p170 = por %p168, %p169
    %p172 = scmp.ne.s32.totalorder %s157, %s171
    %p173 = scmp.eq.s32.totalorder %s21, 0
    %p174 = por %p172, %p173
    %s176 = sadd.s32 %s175, 1
    %p179 = scmp.eq.s32.totalorder %s15, 1
    %p180 = scmp.ne.s32.totalorder %s175, %s177
    %p181 = scmp.eq.s32.totalorder %s15, 0
    %p182 = por %p180, %p181
    %p183 = scmp.ne.s32.totalorder %s175, %s177
    %p184 = scmp.eq.s32.totalorder %s20, 1
    %p185 = por %p183, %p184
    %p186 = scmp.ne.s32.totalorder %s177, %s178
    %p187 = scmp.eq.s32.totalorder %s20, 0
    %p188 = por %p186, %p187
    %p189 = scmp.ne.s32.totalorder %s177, %s178
    %p190 = scmp.eq.s32.totalorder %s21, 1
    %p191 = por %p189, %p190
    %p193 = scmp.ne.s32.totalorder %s178, %s192
    %p194 = scmp.eq.s32.totalorder %s21, 0
    %p195 = por %p193, %p194
    %s197 = sadd.s32 %s196, 1
    %p200 = scmp.eq.s32.totalorder %s15, 1
    %p201 = scmp.ne.s32.totalorder %s196, %s198
    %p202 = scmp.eq.s32.totalorder %s15, 0
    %p203 = por %p201, %p202
    %p204 = scmp.ne.s32.totalorder %s196, %s198
    %p205 = scmp.eq.s32.totalorder %s20, 1
    %p206 = por %p204, %p205
    %p207 = scmp.ne.s32.totalorder %s198, %s199
    %p208 = scmp.eq.s32.totalorder %s20, 0
    %p209 = por %p207, %p208
    %p210 = scmp.ne.s32.totalorder %s198, %s199
    %p211 = scmp.eq.s32.totalorder %s21, 1
    %p212 = por %p210, %p211
    %p214 = scmp.ne.s32.totalorder %s199, %s213
    %p215 = scmp.eq.s32.totalorder %s21, 0
    %p216 = por %p214, %p215
    %s217 = ssub.s32 %s15, %s22
    %p218 = scmp.eq.s32.totalorder %s217, 0
    %s220 = sadd.s32 %s219, 1
    %s221 = scalar_select %p218, %s219, %s220
    %p224 = pneg %p218
    %p225 = scmp.eq.s32.totalorder %s15, 1
    %p226 = por %p224, %p225
    %p227 = scmp.ne.s32.totalorder %s219, %s222
    %p228 = scmp.eq.s32.totalorder %s15, 0
    %p229 = por %p227, %p228
    %p230 = scmp.ne.s32.totalorder %s219, %s222
    %p231 = scmp.eq.s32.totalorder %s20, 1
    %p232 = por %p230, %p231
    %p233 = scmp.ne.s32.totalorder %s222, %s223
    %p234 = scmp.eq.s32.totalorder %s20, 0
    %p235 = por %p233, %p234
    %p236 = scmp.ne.s32.totalorder %s222, %s223
    %p237 = scmp.eq.s32.totalorder %s21, 1
    %p238 = por %p236, %p237
    %p240 = scmp.ne.s32.totalorder %s223, %s239
    %p241 = scmp.eq.s32.totalorder %s21, 0
    %p242 = por %p240, %p241
    %p243 = scmp.le.s32.totalorder 1, %s15
    %p244 = scmp.lt.s32.totalorder %s15, 3
    %p245 = pnand %p243, %p244
    %p246 = pneg %p245
    // Predicated region
    $region9: #{edge_message_passing.2} parent=5 // pred_check
      _
    $region10: #{edge_message_passing.2} parent=5 // pred_check_branch
      %248 = sbr.rel (%p245) target = $region12
    $region11: #{edge_message_passing.2} parent=5 // pred_region
      %s249 = ssub.s32 %s15, 1
      // Predicated region
      $region13: #{edge_message_passing.2} parent=11 // pred_check
        %p250 = pneg %p62
      $region14: #{edge_message_passing.2} parent=11 // pred_check_branch
        %252 = sbr.rel (%p250) target = $region16
      $region15: #{edge_message_passing.2} parent=11 // pred_region
        _
      $region16: #{edge_message_passing.2} parent=11 // pred_fallthru
        _
      // Predicated region
      $region17: #{edge_message_passing.2} parent=11 // pred_check
        %p253 = pneg %p83
      $region18: #{edge_message_passing.2} parent=11 // pred_check_branch
        %255 = sbr.rel (%p253) target = $region20
      $region19: #{edge_message_passing.2} parent=11 // pred_region
        _
      $region20: #{edge_message_passing.2} parent=11 // pred_fallthru
        _
      // Predicated region
      $region21: #{edge_message_passing.2} parent=11 // pred_check
        %p256 = pneg %p104
      $region22: #{edge_message_passing.2} parent=11 // pred_check_branch
        %258 = sbr.rel (%p256) target = $region24
      $region23: #{edge_message_passing.2} parent=11 // pred_region
        _
      $region24: #{edge_message_passing.2} parent=11 // pred_fallthru
        _
      // Predicated region
      $region25: #{edge_message_passing.2} parent=11 // pred_check
        %p259 = pneg %p125
      $region26: #{edge_message_passing.2} parent=11 // pred_check_branch
        %261 = sbr.rel (%p259) target = $region28
      $region27: #{edge_message_passing.2} parent=11 // pred_region
        _
      $region28: #{edge_message_passing.2} parent=11 // pred_fallthru
        _
      // Predicated region
      $region29: #{edge_message_passing.2} parent=11 // pred_check
        %p262 = pneg %p146
      $region30: #{edge_message_passing.2} parent=11 // pred_check_branch
        %264 = sbr.rel (%p262) target = $region32
      $region31: #{edge_message_passing.2} parent=11 // pred_region
        _
      $region32: #{edge_message_passing.2} parent=11 // pred_fallthru
        _
      // Predicated region
      $region33: #{edge_message_passing.2} parent=11 // pred_check
        %p265 = pneg %p167
      $region34: #{edge_message_passing.2} parent=11 // pred_check_branch
        %267 = sbr.rel (%p265) target = $region36
      $region35: #{edge_message_passing.2} parent=11 // pred_region
        _
      $region36: #{edge_message_passing.2} parent=11 // pred_fallthru
        _
      // Predicated region
      $region37: #{edge_message_passing.2} parent=11 // pred_check
        %p268 = pneg %p188
      $region38: #{edge_message_passing.2} parent=11 // pred_check_branch
        %270 = sbr.rel (%p268) target = $region40
      $region39: #{edge_message_passing.2} parent=11 // pred_region
        _
      $region40: #{edge_message_passing.2} parent=11 // pred_fallthru
        _
      // Predicated region
      $region41: #{edge_message_passing.2} parent=11 // pred_check
        %p271 = pneg %p209
      $region42: #{edge_message_passing.2} parent=11 // pred_check_branch
        %273 = sbr.rel (%p271) target = $region44
      $region43: #{edge_message_passing.2} parent=11 // pred_region
        _
      $region44: #{edge_message_passing.2} parent=11 // pred_fallthru
        _
    $region12: #{edge_message_passing.2} parent=5 // pred_fallthru
      _
    %p274 = scmp.lt.s32.totalorder %s15, 2
    // Predicated region
    $region45: #{edge_message_passing.2} parent=5 // pred_check
      %p275 = pneg %p274
    $region46: #{edge_message_passing.2} parent=5 // pred_check_branch
      %277 = sbr.rel (%p275) target = $region48
    $region47: #{edge_message_passing.2} parent=5 // pred_region
      // Predicated region
      $region49: #{edge_message_passing.2} parent=47 // pred_check
        %p278 = pneg %p35
      $region50: #{edge_message_passing.2} parent=47 // pred_check_branch
        %280 = sbr.rel (%p278) target = $region52
      $region51: #{edge_message_passing.2} parent=47 // pred_region
        %s281 = smul.u32 2, %s15
        %p282 = scmp.lt.s32.totalorder %s281, 3
        %s283 = scalar_select %p282, %s281, 3
        %s284 = smul.addr %s283, 4
        %s285 = smul.addr %s284, 8
        %s286 = scalar_lea.vmem %s0, %s285
        %s287 = smul.u32 2, %s15
      $region52: #{edge_message_passing.2} parent=47 // pred_fallthru
        _
    $region48: #{edge_message_passing.2} parent=5 // pred_fallthru
      _
    %p288 = scmp.le.s32.totalorder 1, %s15
    %p289 = scmp.lt.s32.totalorder %s15, 3
    %p290 = pnand %p288, %p289
    %p291 = pneg %p290
    // Predicated region
    $region53: #{edge_message_passing.2} parent=5 // pred_check
      _
    $region54: #{edge_message_passing.2} parent=5 // pred_check_branch
      %293 = sbr.rel (%p290) target = $region56
    $region55: #{edge_message_passing.2} parent=5 // pred_region
      %s294 = ssub.s32 %s15, 1
      %s295 = smul.u32 2, %s20
      %p296 = scmp.lt.s32.totalorder %s295, 3
      %s297 = scalar_select %p296, %s295, 3
      %s298 = smul.addr %s297, 4
      %s299 = smul.addr %s298, 8
      %s300 = scalar_lea.vmem %s0, %s299
      %p301 = pneg %p41
      %p302 = pneg %p38
      %p303 = pneg %p62
      %p304 = pneg %p59
      %p305 = pneg %p83
      %p306 = pneg %p80
      %p307 = pneg %p104
      %p308 = pneg %p101
      %p309 = pneg %p125
      %p310 = pneg %p122
      %p311 = pneg %p146
      %p312 = pneg %p143
      %p313 = pneg %p167
      %p314 = pneg %p164
      %p315 = pneg %p188
      %p316 = pneg %p185
      %p317 = pneg %p209
      %p318 = pneg %p206
      %p319 = pneg %p235
      %p320 = pneg %p232
      %s321 = smul.u32 2, %s20
      %p322 = scmp.lt.s32.totalorder %s321, 3
      %s323 = scalar_select %p322, %s321, 3
      %s324 = smul.addr %s323, 8
      %s325 = scalar_lea.vmem %s9, %s324
      %s326 = smul.u32 2, %s20
      %p327 = scmp.lt.s32.totalorder %s326, 3
      %s328 = scalar_select %p327, %s326, 3
      %s329 = smul.addr %s328, 4
      %s330 = smul.addr %s329, 8
      %s331 = scalar_lea.vmem %s0, %s330
      %s332 = smul.u32 2, %s20
      %s333 = smul.u32 2, %s20
      %p334 = scmp.lt.s32.totalorder %s333, 3
      %s335 = scalar_select %p334, %s333, 3
      %s336 = smul.addr %s335, 8
      %s337 = scalar_lea.vmem %s9, %s336
      %s338 = smul.u32 2, %s20
      %v339 = vld [vmem:[%s331] sm:$0xff]
      %v340 = vld [vmem:[%s331 + $0x8] sm:$0xff]
      %v341 = vld [vmem:[%s331 + $0x10] sm:$0xff]
      %v342 = vld [vmem:[%s331 + $0x18] sm:$0xff]
      %v343 = vld [vmem:[%s331 + $0x20] sm:$0xff]
      %v344 = vld [vmem:[%s331 + $0x28] sm:$0xff]
      %v345 = vld [vmem:[%s331 + $0x30] sm:$0xff]
      %v346 = vld [vmem:[%s331 + $0x38] sm:$0xff]
      %v347 = vld [vmem:[%s1] sm:$0x1]
      %v348 = vld [vmem:[%s2] sm:$0x1]
      %349 = vadd.xlane.f32.xlu0 %v339
      %v350 = vpop.xlane.xlu0 %349
      %351 = vadd.xlane.f32.xlu0 %v343
      %v352 = vpop.xlane.xlu0 %351
      %v353 = vmul.f32 %v339, %v339
      %v354 = vmul.f32 %v343, %v343
      %355 = vadd.xlane.f32.xlu0 %v353
      %v356 = vpop.xlane.xlu0 %355
      %357 = vadd.xlane.f32.xlu0 %v354
      %v358 = vpop.xlane.xlu0 %357
      %v359 = vrcp.pop 16.0
      %v360 = vmul.f32 16.0, %v359
      %v361 = vsub.f32 1.0, %v360
      %v362 = vmul.f32 %v359, %v361
      %v363 = vadd.f32 %v359, %v362
      %vm364 = vweird.f32 %v359
      %v365 = vsel %vm364, %v359, %v363
      %v366 = vmul.f32 %v350, %v365
      %v367 = vmul.f32 %v352, %v365
      %v368 = vmul.f32 %v356, %v365
      %v369 = vmul.f32 %v358, %v365
      %v370 = vmul.f32 %v366, %v366
      %v371 = vmul.f32 %v367, %v367
      %v372 = vsub.f32 %v368, %v370
      %v373 = vsub.f32 %v369, %v371
      %v374 = vsub.f32 %v339, %v366
      %v375 = vsub.f32 %v343, %v367
      %v376 = vadd.f32 %v372, 1e-05
      %v377 = vadd.f32 %v373, 1e-05
      %v378 = vrsqrt.pop %v376
      %v379 = vmul.f32 %v378, %v376
      %v380 = vmul.f32 %v379, %v378
      %v381 = vmul.f32 0.5, %v380
      %v382 = vsub.f32 1.5, %v381
      %v383 = vmul.f32 %v378, %v382
      %vm384 = vweird.f32 %v376
      %vm385 = vweird.f32 %v378
      %vm386 = vmor %vm384, %vm385
      %v387 = vsel %vm386, %v378, %v383
      %v388 = vrsqrt.pop %v377
      %v389 = vmul.f32 %v388, %v377
      %v390 = vmul.f32 %v389, %v388
      %v391 = vmul.f32 0.5, %v390
      %v392 = vsub.f32 1.5, %v391
      %v393 = vmul.f32 %v388, %v392
      %vm394 = vweird.f32 %v377
      %vm395 = vweird.f32 %v388
      %vm396 = vmor %vm394, %vm395
      %v397 = vsel %vm396, %v388, %v393
      %v398 = vmul.f32 %v374, %v387
      %v399 = vmul.f32 %v375, %v397
      %v400 = vperm.slane %v347, 0
      %v401 = vmul.f32 %v398, %v400
      %v402 = vmul.f32 %v399, %v400
      %v403 = vperm.slane %v348, 0
      %v404 = vadd.f32 %v401, %v403
      %v405 = vadd.f32 %v402, %v403
      %v406 = vmax.f32 %v404, 0.0
      %v407 = vmax.f32 %v405, 0.0
      %v408 = vpack.c.bf16 %v406, %v406
      %v409 = vpack.c.bf16 %v407, %v407
      %v410 = vld [vmem:[%s1 + $0x1] sm:$0x1]
      %v411 = vld [vmem:[%s2 + $0x1] sm:$0x1]
      %412 = vadd.xlane.f32.xlu0 %v340
      %v413 = vpop.xlane.xlu0 %412
      %414 = vadd.xlane.f32.xlu0 %v344
      %v415 = vpop.xlane.xlu0 %414
      %v416 = vmul.f32 %v340, %v340
      %v417 = vmul.f32 %v344, %v344
      %418 = vadd.xlane.f32.xlu0 %v416
      %v419 = vpop.xlane.xlu0 %418
      %420 = vadd.xlane.f32.xlu0 %v417
      %v421 = vpop.xlane.xlu0 %420
      %v422 = vmul.f32 %v413, %v365
      %v423 = vmul.f32 %v415, %v365
      %v424 = vmul.f32 %v419, %v365
      %v425 = vmul.f32 %v421, %v365
      %v426 = vmul.f32 %v422, %v422
      %v427 = vmul.f32 %v423, %v423
      %v428 = vsub.f32 %v424, %v426
      %v429 = vsub.f32 %v425, %v427
      %v430 = vsub.f32 %v340, %v422
      %v431 = vsub.f32 %v344, %v423
      %v432 = vadd.f32 %v428, 1e-05
      %v433 = vadd.f32 %v429, 1e-05
      %v434 = vrsqrt.pop %v432
      %v435 = vmul.f32 %v434, %v432
      %v436 = vmul.f32 %v435, %v434
      %v437 = vmul.f32 0.5, %v436
      %v438 = vsub.f32 1.5, %v437
      %v439 = vmul.f32 %v434, %v438
      %vm440 = vweird.f32 %v432
      %vm441 = vweird.f32 %v434
      %vm442 = vmor %vm440, %vm441
      %v443 = vsel %vm442, %v434, %v439
      %v444 = vrsqrt.pop %v433
      %v445 = vmul.f32 %v444, %v433
      %v446 = vmul.f32 %v445, %v444
      %v447 = vmul.f32 0.5, %v446
      %v448 = vsub.f32 1.5, %v447
      %v449 = vmul.f32 %v444, %v448
      %vm450 = vweird.f32 %v433
      %vm451 = vweird.f32 %v444
      %vm452 = vmor %vm450, %vm451
      %v453 = vsel %vm452, %v444, %v449
      %v454 = vmul.f32 %v430, %v443
      %v455 = vmul.f32 %v431, %v453
      %v456 = vperm.slane %v410, 0
      %v457 = vmul.f32 %v454, %v456
      %v458 = vmul.f32 %v455, %v456
      %v459 = vperm.slane %v411, 0
      %v460 = vadd.f32 %v457, %v459
      %v461 = vadd.f32 %v458, %v459
      %v462 = vmax.f32 %v460, 0.0
      %v463 = vmax.f32 %v461, 0.0
      %v464 = vpack.c.bf16 %v462, %v462
      %v465 = vpack.c.bf16 %v463, %v463
      %v466 = vld [vmem:[%s1 + $0x2] sm:$0x1]
      %v467 = vld [vmem:[%s2 + $0x2] sm:$0x1]
      %468 = vadd.xlane.f32.xlu0 %v341
      %v469 = vpop.xlane.xlu0 %468
      %470 = vadd.xlane.f32.xlu0 %v345
      %v471 = vpop.xlane.xlu0 %470
      %v472 = vmul.f32 %v341, %v341
      %v473 = vmul.f32 %v345, %v345
      %474 = vadd.xlane.f32.xlu0 %v472
      %v475 = vpop.xlane.xlu0 %474
      %476 = vadd.xlane.f32.xlu0 %v473
      %v477 = vpop.xlane.xlu0 %476
      %v478 = vrcp.pop 8.0
      %v479 = vmul.f32 8.0, %v478
      %v480 = vsub.f32 1.0, %v479
      %v481 = vmul.f32 %v478, %v480
      %v482 = vadd.f32 %v478, %v481
      %vm483 = vweird.f32 %v478
      %v484 = vsel %vm483, %v478, %v482
      %v485 = vmul.f32 %v469, %v484
      %v486 = vmul.f32 %v471, %v484
      %v487 = vmul.f32 %v475, %v484
      %v488 = vmul.f32 %v477, %v484
      %v489 = vmul.f32 %v485, %v485
      %v490 = vmul.f32 %v486, %v486
      %v491 = vsub.f32 %v487, %v489
      %v492 = vsub.f32 %v488, %v490
      %v493 = vsub.f32 %v341, %v485
      %v494 = vsub.f32 %v345, %v486
      %v495 = vadd.f32 %v491, 1e-05
      %v496 = vadd.f32 %v492, 1e-05
      %v497 = vrsqrt.pop %v495
      %v498 = vmul.f32 %v497, %v495
      %v499 = vmul.f32 %v498, %v497
      %v500 = vmul.f32 0.5, %v499
      %v501 = vsub.f32 1.5, %v500
      %v502 = vmul.f32 %v497, %v501
      %vm503 = vweird.f32 %v495
      %vm504 = vweird.f32 %v497
      %vm505 = vmor %vm503, %vm504
      %v506 = vsel %vm505, %v497, %v502
      %v507 = vrsqrt.pop %v496
      %v508 = vmul.f32 %v507, %v496
      %v509 = vmul.f32 %v508, %v507
      %v510 = vmul.f32 0.5, %v509
      %v511 = vsub.f32 1.5, %v510
      %v512 = vmul.f32 %v507, %v511
      %vm513 = vweird.f32 %v496
      %vm514 = vweird.f32 %v507
      %vm515 = vmor %vm513, %vm514
      %v516 = vsel %vm515, %v507, %v512
      %v517 = vmul.f32 %v493, %v506
      %v518 = vmul.f32 %v494, %v516
      %v519 = vperm.slane %v466, 0
      %v520 = vmul.f32 %v517, %v519
      %v521 = vmul.f32 %v518, %v519
      %v522 = vperm.slane %v467, 0
      %v523 = vadd.f32 %v520, %v522
      %v524 = vadd.f32 %v521, %v522
      %v525 = vmax.f32 %v523, 0.0
      %v526 = vmax.f32 %v524, 0.0
      %v527 = vpack.c.bf16 %v525, %v525
      %v528 = vpack.c.bf16 %v526, %v526
      %v529 = vld [vmem:[%s1 + $0x3] sm:$0x1]
      %v530 = vld [vmem:[%s2 + $0x3] sm:$0x1]
      %531 = vadd.xlane.f32.xlu0 %v342
      %v532 = vpop.xlane.xlu0 %531
      %533 = vadd.xlane.f32.xlu0 %v346
      %v534 = vpop.xlane.xlu0 %533
      %v535 = vmul.f32 %v342, %v342
      %v536 = vmul.f32 %v346, %v346
      %537 = vadd.xlane.f32.xlu0 %v535
      %v538 = vpop.xlane.xlu0 %537
      %539 = vadd.xlane.f32.xlu0 %v536
      %v540 = vpop.xlane.xlu0 %539
      %v541 = vrcp.pop 12.0
      %v542 = vmul.f32 12.0, %v541
      %v543 = vsub.f32 1.0, %v542
      %v544 = vmul.f32 %v541, %v543
      %v545 = vadd.f32 %v541, %v544
      %vm546 = vweird.f32 %v541
      %v547 = vsel %vm546, %v541, %v545
      %v548 = vmul.f32 %v532, %v547
      %v549 = vmul.f32 %v534, %v547
      %v550 = vmul.f32 %v538, %v547
      %v551 = vmul.f32 %v540, %v547
      %v552 = vmul.f32 %v548, %v548
      %v553 = vmul.f32 %v549, %v549
      %v554 = vsub.f32 %v550, %v552
      %v555 = vsub.f32 %v551, %v553
      %v556 = vsub.f32 %v342, %v548
      %v557 = vsub.f32 %v346, %v549
      %v558 = vadd.f32 %v554, 1e-05
      %v559 = vadd.f32 %v555, 1e-05
      %v560 = vrsqrt.pop %v558
      %v561 = vmul.f32 %v560, %v558
      %v562 = vmul.f32 %v561, %v560
      %v563 = vmul.f32 0.5, %v562
      %v564 = vsub.f32 1.5, %v563
      %v565 = vmul.f32 %v560, %v564
      %vm566 = vweird.f32 %v558
      %vm567 = vweird.f32 %v560
      %vm568 = vmor %vm566, %vm567
      %v569 = vsel %vm568, %v560, %v565
      %v570 = vrsqrt.pop %v559
      %v571 = vmul.f32 %v570, %v559
      %v572 = vmul.f32 %v571, %v570
      %v573 = vmul.f32 0.5, %v572
      %v574 = vsub.f32 1.5, %v573
      %v575 = vmul.f32 %v570, %v574
      %vm576 = vweird.f32 %v559
      %vm577 = vweird.f32 %v570
      %vm578 = vmor %vm576, %vm577
      %v579 = vsel %vm578, %v570, %v575
      %v580 = vmul.f32 %v556, %v569
      %v581 = vmul.f32 %v557, %v579
      %v582 = vperm.slane %v529, 0
      %v583 = vmul.f32 %v580, %v582
      %v584 = vmul.f32 %v581, %v582
      %v585 = vperm.slane %v530, 0
      %v586 = vadd.f32 %v583, %v585
      %v587 = vadd.f32 %v584, %v585
      %v588 = vmax.f32 %v586, 0.0
      %v589 = vmax.f32 %v587, 0.0
      %v590 = vpack.c.bf16 %v588, %v588
      %v591 = vpack.c.bf16 %v589, %v589
      %v594 = vunpack.c.l.b16 %v408
      %v595 = vunpack.c.l.b16 %v409
      %v596 = vpack.c.b16 %v595, %v594
      %v600 = vunpack.c.l.b16 %v464
      %v601 = vunpack.c.l.b16 %v465
      %v602 = vpack.c.b16 %v601, %v600
      %v606 = vunpack.c.l.b16 %v527
      %v607 = vunpack.c.l.b16 %v528
      %v608 = vpack.c.b16 %v607, %v606
      %v612 = vunpack.c.l.b16 %v590
      %v613 = vunpack.c.l.b16 %v591
      %v614 = vpack.c.b16 %v613, %v612
      %v616 = vld [vmem:[%s3] sm:$0xf]
      %v617 = vld [vmem:[%s3 + $0x4] sm:$0xf]
      %v618 = vld [vmem:[%s3 + $0x8] sm:$0xf]
      %v619 = vld [vmem:[%s3 + $0xc] sm:$0xf]
      %v620 = vld [vmem:[%s3 + $0x10] sm:$0xf]
      %v621 = vld [vmem:[%s3 + $0x14] sm:$0xf]
      %v622 = vld [vmem:[%s3 + $0x18] sm:$0xf]
      %v623 = vld [vmem:[%s3 + $0x1c] sm:$0xf]
      %v624 = vld [vmem:[%s3 + $0x20] sm:$0xf]
      %v625 = vld [vmem:[%s3 + $0x24] sm:$0xf]
      %v626 = vld [vmem:[%s3 + $0x28] sm:$0xf]
      %v627 = vld [vmem:[%s3 + $0x2c] sm:$0xf]
      %v628 = vld [vmem:[%s3 + $0x30] sm:$0xf]
      %v629 = vld [vmem:[%s3 + $0x34] sm:$0xf]
      %v630 = vld [vmem:[%s3 + $0x38] sm:$0xf]
      %v631 = vld [vmem:[%s3 + $0x3c] sm:$0xf]
      %v632 = vld [vmem:[%s3 + $0x40] sm:$0xf]
      %v633 = vld [vmem:[%s3 + $0x44] sm:$0xf]
      %v634 = vld [vmem:[%s3 + $0x48] sm:$0xf]
      %v635 = vld [vmem:[%s3 + $0x4c] sm:$0xf]
      %v636 = vld [vmem:[%s3 + $0x50] sm:$0xf]
      %v637 = vld [vmem:[%s3 + $0x54] sm:$0xf]
      %v638 = vld [vmem:[%s3 + $0x58] sm:$0xf]
      %v639 = vld [vmem:[%s3 + $0x5c] sm:$0xf]
      %v640 = vld [vmem:[%s3 + $0x60] sm:$0xf]
      %v641 = vld [vmem:[%s3 + $0x64] sm:$0xf]
      %v642 = vld [vmem:[%s3 + $0x68] sm:$0xf]
      %v643 = vld [vmem:[%s3 + $0x6c] sm:$0xf]
      %v644 = vld [vmem:[%s3 + $0x70] sm:$0xf]
      %v645 = vld [vmem:[%s3 + $0x74] sm:$0xf]
      %v646 = vld [vmem:[%s3 + $0x78] sm:$0xf]
      %v647 = vld [vmem:[%s3 + $0x7c] sm:$0xf]
      %v648 = vld [vmem:[%s3 + $0x80] sm:$0xf]
      %v649 = vld [vmem:[%s3 + $0x84] sm:$0xf]
      %v650 = vld [vmem:[%s3 + $0x88] sm:$0xf]
      %v651 = vld [vmem:[%s3 + $0x8c] sm:$0xf]
      %v652 = vld [vmem:[%s3 + $0x90] sm:$0xf]
      %v653 = vld [vmem:[%s3 + $0x94] sm:$0xf]
      %v654 = vld [vmem:[%s3 + $0x98] sm:$0xf]
      %v655 = vld [vmem:[%s3 + $0x9c] sm:$0xf]
      %v656 = vld [vmem:[%s3 + $0xa0] sm:$0xf]
      %v657 = vld [vmem:[%s3 + $0xa4] sm:$0xf]
      %v658 = vld [vmem:[%s3 + $0xa8] sm:$0xf]
      %v659 = vld [vmem:[%s3 + $0xac] sm:$0xf]
      %v660 = vld [vmem:[%s3 + $0xb0] sm:$0xf]
      %v661 = vld [vmem:[%s3 + $0xb4] sm:$0xf]
      %v662 = vld [vmem:[%s3 + $0xb8] sm:$0xf]
      %v663 = vld [vmem:[%s3 + $0xbc] sm:$0xf]
      %v664 = vld [vmem:[%s3 + $0xc0] sm:$0xf]
      %v665 = vld [vmem:[%s3 + $0xc4] sm:$0xf]
      %v666 = vld [vmem:[%s3 + $0xc8] sm:$0xf]
      %v667 = vld [vmem:[%s3 + $0xcc] sm:$0xf]
      %v668 = vld [vmem:[%s3 + $0xd0] sm:$0xf]
      %v669 = vld [vmem:[%s3 + $0xd4] sm:$0xf]
      %v670 = vld [vmem:[%s3 + $0xd8] sm:$0xf]
      %v671 = vld [vmem:[%s3 + $0xdc] sm:$0xf]
      %v672 = vld [vmem:[%s3 + $0xe0] sm:$0xf]
      %v673 = vld [vmem:[%s3 + $0xe4] sm:$0xf]
      %v674 = vld [vmem:[%s3 + $0xe8] sm:$0xf]
      %v675 = vld [vmem:[%s3 + $0xec] sm:$0xf]
      %v676 = vld [vmem:[%s3 + $0xf0] sm:$0xf]
      %v677 = vld [vmem:[%s3 + $0xf4] sm:$0xf]
      %v678 = vld [vmem:[%s3 + $0xf8] sm:$0xf]
      %v679 = vld [vmem:[%s3 + $0xfc] sm:$0xf]
      %v680 = vld [vmem:[%s4] sm:$0x1]
      %v682 = vperm.slane %v680, 0
      %v748 = vunpack.c.l.b16 %v616
      %v749 = vunpack.c.l.b16 %v617
      %v750 = vunpack.c.l.b16 %v618
      %v751 = vunpack.c.l.b16 %v619
      %v752 = vunpack.c.l.b16 %v620
      %v753 = vunpack.c.l.b16 %v621
      %v754 = vunpack.c.l.b16 %v622
      %v755 = vunpack.c.l.b16 %v623
      %v756 = vunpack.c.l.b16 %v624
      %v757 = vunpack.c.l.b16 %v625
      %v758 = vunpack.c.l.b16 %v626
      %v759 = vunpack.c.l.b16 %v627
      %v760 = vunpack.c.l.b16 %v628
      %v761 = vunpack.c.l.b16 %v629
      %v762 = vunpack.c.l.b16 %v630
      %v763 = vunpack.c.l.b16 %v631
      %v764 = vunpack.c.l.b16 %v632
      %v765 = vunpack.c.l.b16 %v633
      %v766 = vunpack.c.l.b16 %v634
      %v767 = vunpack.c.l.b16 %v635
      %v768 = vunpack.c.l.b16 %v636
      %v769 = vunpack.c.l.b16 %v637
      %v770 = vunpack.c.l.b16 %v638
      %v771 = vunpack.c.l.b16 %v639
      %v772 = vunpack.c.l.b16 %v640
      %v773 = vunpack.c.l.b16 %v641
      %v774 = vunpack.c.l.b16 %v642
      %v775 = vunpack.c.l.b16 %v643
      %v776 = vunpack.c.l.b16 %v644
      %v777 = vunpack.c.l.b16 %v645
      %v778 = vunpack.c.l.b16 %v646
      %v779 = vunpack.c.l.b16 %v647
      %v780 = vunpack.c.l.b16 %v648
      %v781 = vunpack.c.l.b16 %v649
      %v782 = vunpack.c.l.b16 %v650
      %v783 = vunpack.c.l.b16 %v651
      %v784 = vunpack.c.l.b16 %v652
      %v785 = vunpack.c.l.b16 %v653
      %v786 = vunpack.c.l.b16 %v654
      %v787 = vunpack.c.l.b16 %v655
      %v788 = vunpack.c.l.b16 %v656
      %v789 = vunpack.c.l.b16 %v657
      %v790 = vunpack.c.l.b16 %v658
      %v791 = vunpack.c.l.b16 %v659
      %v792 = vunpack.c.l.b16 %v660
      %v793 = vunpack.c.l.b16 %v661
      %v794 = vunpack.c.l.b16 %v662
      %v795 = vunpack.c.l.b16 %v663
      %v796 = vunpack.c.l.b16 %v664
      %v797 = vunpack.c.l.b16 %v665
      %v798 = vunpack.c.l.b16 %v666
      %v799 = vunpack.c.l.b16 %v667
      %v800 = vunpack.c.l.b16 %v668
      %v801 = vunpack.c.l.b16 %v669
      %v802 = vunpack.c.l.b16 %v670
      %v803 = vunpack.c.l.b16 %v671
      %v804 = vunpack.c.l.b16 %v672
      %v805 = vunpack.c.l.b16 %v673
      %v806 = vunpack.c.l.b16 %v674
      %v807 = vunpack.c.l.b16 %v675
      %v808 = vunpack.c.l.b16 %v676
      %v809 = vunpack.c.l.b16 %v677
      %v810 = vunpack.c.l.b16 %v678
      %v811 = vunpack.c.l.b16 %v679
      %v812 = vpack.c.b16 %v749, %v748
      %v813 = vpack.c.b16 %v751, %v750
      %v814 = vpack.c.b16 %v753, %v752
      %v815 = vpack.c.b16 %v755, %v754
      %v816 = vpack.c.b16 %v757, %v756
      %v817 = vpack.c.b16 %v759, %v758
      %v818 = vpack.c.b16 %v761, %v760
      %v819 = vpack.c.b16 %v763, %v762
      %v820 = vpack.c.b16 %v765, %v764
      %v821 = vpack.c.b16 %v767, %v766
      %v822 = vpack.c.b16 %v769, %v768
      %v823 = vpack.c.b16 %v771, %v770
      %v824 = vpack.c.b16 %v773, %v772
      %v825 = vpack.c.b16 %v775, %v774
      %v826 = vpack.c.b16 %v777, %v776
      %v827 = vpack.c.b16 %v779, %v778
      %v828 = vpack.c.b16 %v781, %v780
      %v829 = vpack.c.b16 %v783, %v782
      %v830 = vpack.c.b16 %v785, %v784
      %v831 = vpack.c.b16 %v787, %v786
      %v832 = vpack.c.b16 %v789, %v788
      %v833 = vpack.c.b16 %v791, %v790
      %v834 = vpack.c.b16 %v793, %v792
      %v835 = vpack.c.b16 %v795, %v794
      %v836 = vpack.c.b16 %v797, %v796
      %v837 = vpack.c.b16 %v799, %v798
      %v838 = vpack.c.b16 %v801, %v800
      %v839 = vpack.c.b16 %v803, %v802
      %v840 = vpack.c.b16 %v805, %v804
      %v841 = vpack.c.b16 %v807, %v806
      %v842 = vpack.c.b16 %v809, %v808
      %v843 = vpack.c.b16 %v811, %v810
      %876 = vmatpush.bf16.msra.mxu0 %v819
      %877 = vmatpush.bf16.msra.mxu0 %v818
      %878 = vmatpush.bf16.msra.mxu0 %v817
      %879 = vmatpush.bf16.msra.mxu0 %v816
      %880 = vmatpush.bf16.msra.mxu0 %v815
      %881 = vmatpush.bf16.msra.mxu0 %v814
      %882 = vmatpush.bf16.msra.mxu0 %v813
      %883 = vmatpush.bf16.msra.mxu0 %v812
      %884 = vmatmul.bf16.gmra.mxu0 %v596
      %v885 = vpop.f32.mrf.mxu0
      %v886 = vadd.f32 %v682, %v885
      %v887 = vpop.f32.mrf.mxu0
      %v888 = vadd.f32 %v682, %v887
      %889 = vdwg.mxu0
      %890 = vmatpush.bf16.msra.mxu0 %v827
      %891 = vmatpush.bf16.msra.mxu0 %v826
      %892 = vmatpush.bf16.msra.mxu0 %v825
      %893 = vmatpush.bf16.msra.mxu0 %v824
      %894 = vmatpush.bf16.msra.mxu0 %v823
      %895 = vmatpush.bf16.msra.mxu0 %v822
      %896 = vmatpush.bf16.msra.mxu0 %v821
      %897 = vmatpush.bf16.msra.mxu0 %v820
      %898 = vmatmul.bf16.gmra.mxu0 %v602
      %v899 = vpop.f32.mrf.mxu0
      %v900 = vadd.f32 %v886, %v899
      %v901 = vpop.f32.mrf.mxu0
      %v902 = vadd.f32 %v888, %v901
      %903 = vdwg.mxu0
      %904 = vmatpush.bf16.msra.mxu0 %v835
      %905 = vmatpush.bf16.msra.mxu0 %v834
      %906 = vmatpush.bf16.msra.mxu0 %v833
      %907 = vmatpush.bf16.msra.mxu0 %v832
      %908 = vmatpush.bf16.msra.mxu0 %v831
      %909 = vmatpush.bf16.msra.mxu0 %v830
      %910 = vmatpush.bf16.msra.mxu0 %v829
      %911 = vmatpush.bf16.msra.mxu0 %v828
      %912 = vmatmul.bf16.gmra.mxu0 %v608
      %v913 = vpop.f32.mrf.mxu0
      %v914 = vadd.f32 %v900, %v913
      %v915 = vpop.f32.mrf.mxu0
      %v916 = vadd.f32 %v902, %v915
      %917 = vdwg.mxu0
      %918 = vmatpush.bf16.msra.mxu0 %v843
      %919 = vmatpush.bf16.msra.mxu0 %v842
      %920 = vmatpush.bf16.msra.mxu0 %v841
      %921 = vmatpush.bf16.msra.mxu0 %v840
      %922 = vmatpush.bf16.msra.mxu0 %v839
      %923 = vmatpush.bf16.msra.mxu0 %v838
      %924 = vmatpush.bf16.msra.mxu0 %v837
      %925 = vmatpush.bf16.msra.mxu0 %v836
      %926 = vmatmul.bf16.gmra.mxu0 %v614
      %v927 = vpop.f32.mrf.mxu0
      %v928 = vadd.f32 %v914, %v927
      %v929 = vpop.f32.mrf.mxu0
      %v930 = vadd.f32 %v916, %v929
      %931 = vdwg.mxu0
      %v932 = vld [vmem:[%s5] sm:$0x1]
      %v933 = vld [vmem:[%s6] sm:$0x1]
      %934 = vadd.xlane.f32.xlu0 %v928
      %v935 = vpop.xlane.xlu0 %934
      %936 = vadd.xlane.f32.xlu0 %v930
      %v937 = vpop.xlane.xlu0 %936
      %v938 = vmul.f32 %v928, %v928
      %v939 = vmul.f32 %v930, %v930
      %940 = vadd.xlane.f32.xlu0 %v938
      %v941 = vpop.xlane.xlu0 %940
      %942 = vadd.xlane.f32.xlu0 %v939
      %v943 = vpop.xlane.xlu0 %942
      %v944 = vrcp.pop 32.0
      %v945 = vmul.f32 32.0, %v944
      %v946 = vsub.f32 1.0, %v945
      %v947 = vmul.f32 %v944, %v946
      %v948 = vadd.f32 %v944, %v947
      %vm949 = vweird.f32 %v944
      %v950 = vsel %vm949, %v944, %v948
      %v951 = vmul.f32 %v935, %v950
      %v952 = vmul.f32 %v937, %v950
      %v953 = vmul.f32 %v941, %v950
      %v954 = vmul.f32 %v943, %v950
      %v955 = vmul.f32 %v951, %v951
      %v956 = vmul.f32 %v952, %v952
      %v957 = vsub.f32 %v953, %v955
      %v958 = vsub.f32 %v954, %v956
      %v959 = vsub.f32 %v928, %v951
      %v960 = vsub.f32 %v930, %v952
      %v961 = vadd.f32 %v957, 1e-05
      %v962 = vadd.f32 %v958, 1e-05
      %v963 = vrsqrt.pop %v961
      %v964 = vmul.f32 %v963, %v961
      %v965 = vmul.f32 %v964, %v963
      %v966 = vmul.f32 0.5, %v965
      %v967 = vsub.f32 1.5, %v966
      %v968 = vmul.f32 %v963, %v967
      %vm969 = vweird.f32 %v961
      %vm970 = vweird.f32 %v963
      %vm971 = vmor %vm969, %vm970
      %v972 = vsel %vm971, %v963, %v968
      %v973 = vrsqrt.pop %v962
      %v974 = vmul.f32 %v973, %v962
      %v975 = vmul.f32 %v974, %v973
      %v976 = vmul.f32 0.5, %v975
      %v977 = vsub.f32 1.5, %v976
      %v978 = vmul.f32 %v973, %v977
      %vm979 = vweird.f32 %v962
      %vm980 = vweird.f32 %v973
      %vm981 = vmor %vm979, %vm980
      %v982 = vsel %vm981, %v973, %v978
      %v983 = vmul.f32 %v959, %v972
      %v984 = vmul.f32 %v960, %v982
      %v986 = vperm.slane %v932, 0
      %v988 = vmul.f32 %v983, %v986
      %v989 = vmul.f32 %v984, %v986
      %v991 = vperm.slane %v933, 0
      %v993 = vadd.f32 %v988, %v991
      %v994 = vadd.f32 %v989, %v991
      %v995 = vmax.f32 %v993, 0.0
      %v996 = vmax.f32 %v994, 0.0
      %v997 = vpack.c.bf16 %v996, %v995
      %v998 = vld [vmem:[%s7] sm:$0xf]
      %v999 = vld [vmem:[%s7 + $0x4] sm:$0xf]
      %v1000 = vld [vmem:[%s7 + $0x8] sm:$0xf]
      %v1001 = vld [vmem:[%s7 + $0xc] sm:$0xf]
      %v1002 = vld [vmem:[%s7 + $0x10] sm:$0xf]
      %v1003 = vld [vmem:[%s7 + $0x14] sm:$0xf]
      %v1004 = vld [vmem:[%s7 + $0x18] sm:$0xf]
      %v1005 = vld [vmem:[%s7 + $0x1c] sm:$0xf]
      %v1006 = vld [vmem:[%s7 + $0x20] sm:$0xf]
      %v1007 = vld [vmem:[%s7 + $0x24] sm:$0xf]
      %v1008 = vld [vmem:[%s7 + $0x28] sm:$0xf]
      %v1009 = vld [vmem:[%s7 + $0x2c] sm:$0xf]
      %v1010 = vld [vmem:[%s7 + $0x30] sm:$0xf]
      %v1011 = vld [vmem:[%s7 + $0x34] sm:$0xf]
      %v1012 = vld [vmem:[%s7 + $0x38] sm:$0xf]
      %v1013 = vld [vmem:[%s7 + $0x3c] sm:$0xf]
      %v1014 = vld [vmem:[%s8] sm:$0x1]
      %v1016 = vperm.slane %v1014, 0
      %v1034 = vunpack.c.l.b16 %v998
      %v1035 = vunpack.c.l.b16 %v999
      %v1036 = vunpack.c.l.b16 %v1000
      %v1037 = vunpack.c.l.b16 %v1001
      %v1038 = vunpack.c.l.b16 %v1002
      %v1039 = vunpack.c.l.b16 %v1003
      %v1040 = vunpack.c.l.b16 %v1004
      %v1041 = vunpack.c.l.b16 %v1005
      %v1042 = vunpack.c.l.b16 %v1006
      %v1043 = vunpack.c.l.b16 %v1007
      %v1044 = vunpack.c.l.b16 %v1008
      %v1045 = vunpack.c.l.b16 %v1009
      %v1046 = vunpack.c.l.b16 %v1010
      %v1047 = vunpack.c.l.b16 %v1011
      %v1048 = vunpack.c.l.b16 %v1012
      %v1049 = vunpack.c.l.b16 %v1013
      %v1050 = vpack.c.b16 %v1035, %v1034
      %v1051 = vpack.c.b16 %v1037, %v1036
      %v1052 = vpack.c.b16 %v1039, %v1038
      %v1053 = vpack.c.b16 %v1041, %v1040
      %v1054 = vpack.c.b16 %v1043, %v1042
      %v1055 = vpack.c.b16 %v1045, %v1044
      %v1056 = vpack.c.b16 %v1047, %v1046
      %v1057 = vpack.c.b16 %v1049, %v1048
      %1066 = vmatpush.bf16.msra.mxu0 %v1057
      %1067 = vmatpush.bf16.msra.mxu0 %v1056
      %1068 = vmatpush.bf16.msra.mxu0 %v1055
      %1069 = vmatpush.bf16.msra.mxu0 %v1054
      %1070 = vmatpush.bf16.msra.mxu0 %v1053
      %1071 = vmatpush.bf16.msra.mxu0 %v1052
      %1072 = vmatpush.bf16.msra.mxu0 %v1051
      %1073 = vmatpush.bf16.msra.mxu0 %v1050
      %1074 = vmatmul.bf16.gmra.mxu0 %v997
      %v1075 = vpop.f32.mrf.mxu0
      %v1076 = vadd.f32 %v1016, %v1075
      %v1077 = vpop.f32.mrf.mxu0
      %v1078 = vadd.f32 %v1016, %v1077
      %1079 = vdwg.mxu0
      %v1080 = vadd.f32 %v341, %v1076
      %v1081 = vadd.f32 %v345, %v1078
      %1082 = vst [vmem:[%s337] sm:$0xff] %v1080
      %1083 = vst [vmem:[%s337 + $0x8] sm:$0xff] %v1081
      %s1084 = smul.u32 2, %s20
      %p1085 = scmp.lt.s32.totalorder %s1084, 3
      %s1086 = scalar_select %p1085, %s1084, 3
      %s1087 = smul.addr %s1086, 8
      %s1088 = scalar_lea.vmem %s9, %s1087
      // Predicated region
      $region57: #{edge_message_passing.2} parent=55 // pred_check
        %p1089 = pneg %p232
      $region58: #{edge_message_passing.2} parent=55 // pred_check_branch
        %1091 = sbr.rel (%p1089) target = $region60
      $region59: #{edge_message_passing.2} parent=55 // pred_region
        %s1092 = smul.u32 2, %s20
      $region60: #{edge_message_passing.2} parent=55 // pred_fallthru
        _
    $region56: #{edge_message_passing.2} parent=5 // pred_fallthru
      _
    %p1093 = scmp.le.s32.totalorder 2, %s15
    // Predicated region
    $region61: #{edge_message_passing.2} parent=5 // pred_check
      %p1094 = pneg %p1093
    $region62: #{edge_message_passing.2} parent=5 // pred_check_branch
      %1096 = sbr.rel (%p1094) target = $region64
    $region63: #{edge_message_passing.2} parent=5 // pred_region
      %s1097 = ssub.s32 %s15, 2
      // Predicated region
      $region65: #{edge_message_passing.2} parent=63 // pred_check
        %p1098 = pneg %p238
      $region66: #{edge_message_passing.2} parent=63 // pred_check_branch
        %1100 = sbr.rel (%p1098) target = $region68
      $region67: #{edge_message_passing.2} parent=63 // pred_region
        %s1101 = smul.u32 2, %s21
        %p1102 = scmp.lt.s32.totalorder %s1101, 3
        %s1103 = scalar_select %p1102, %s1101, 3
        %s1104 = smul.addr %s1103, 8
        %s1105 = scalar_lea.vmem %s9, %s1104
      $region68: #{edge_message_passing.2} parent=63 // pred_fallthru
        _
    $region64: #{edge_message_passing.2} parent=5 // pred_fallthru
      _
  $region6: #{edge_message_passing.2} parent=0 // loop_footer
    %s19 = sadd.s32 1, %s15
  $region7: #{edge_message_passing.2} parent=0 // loop_footer_branch
    %14 = sbr.rel target = $region3
  $region8: #{edge_message_passing.2} parent=0 // loop_exit
    _

</llo_original>
